<compile_context>
chip_gen: v7x
topology: tpu7x:2x2x1
jax: 0.10.0
libtpu: 0.0.40
codegen_flags: <defaults>
</compile_context>

<pallas_src>
import functools

import jax
import jax.numpy as jnp
from jax import lax
from jax.experimental import pallas as pl
from jax.experimental.pallas import tpu as pltpu

_EPS = 1e-5  # PyTorch BatchNorm2d default eps


# --------------------------------------------------------------------------
# Fused WideBasic kernel (one grid step == one batch element)
# --------------------------------------------------------------------------
def _wide_basic_kernel(x_ref, s1_ref, sh1_ref, w1_ref, b1_ref,
                       s2_ref, sh2_ref, w2_ref, b2_ref, *rest,
                       H, Ho, stride, conv_shortcut):
    # Ref shapes (lane-dense, per batch element):
    #   x_ref   : (H,   W*Cin)
    #   s1/sh1  : (1,   W*Cin)          BN1 scale/shift, tiled across W
    #   w1_ref  : (3,   W*Cin, W*Co)    banded conv1 matrices, one per dy tap
    #   b1_ref  : (1,   W*Co)
    #   s2/sh2  : (1,   W*Co)
    #   w2_ref  : (3,   W*Co, Wo*Co)    banded conv2 matrices (W-stride folded in)
    #   b2_ref  : (1,   Wo*Co)
    #   [ws_ref : (W*Cin, Wo*Co), bs_ref : (1, Wo*Co)]   if projection shortcut
    #   o_ref   : (Ho,  Wo*Co)
    #   p1_ref  : (H+2, W*Cin)  row-padded scratch (conv1 input)
    #   p2_ref  : (H+2, W*Co)   row-padded scratch (conv2 input)
    if conv_shortcut:
        ws_ref, bs_ref, o_ref, p1_ref, p2_ref = rest
    else:
        o_ref, p1_ref, p2_ref = rest
    f32 = jnp.float32

    # Zero only the two halo rows, every iteration (cheap: one row each).  Done
    # per iteration rather than @pl.when(step == 0) so it stays correct when
    # the "parallel" batch axis is partitioned across TensorCores.
    p1_ref[0:1, :] = jnp.zeros((1, p1_ref.shape[1]), f32)
    p1_ref[H + 1:H + 2, :] = jnp.zeros((1, p1_ref.shape[1]), f32)
    p2_ref[0:1, :] = jnp.zeros((1, p2_ref.shape[1]), f32)
    p2_ref[H + 1:H + 2, :] = jnp.zeros((1, p2_ref.shape[1]), f32)

    x2d = x_ref[...]                                        # (H, W*Cin)

    # ---- BN1 (folded) + ReLU, written into the row-padded scratch ----
    p1_ref[1:H + 1, :] = jnp.maximum(x2d * s1_ref[...] + sh1_ref[...], 0.0)

    # ---- conv1: 3x3, pad=1, stride=1 -> 3 banded MXU matmuls ----
    acc = jnp.dot(p1_ref[0:H, :], w1_ref[0], preferred_element_type=f32)
    acc = acc + jnp.dot(p1_ref[1:H + 1, :], w1_ref[1], preferred_element_type=f32)
    acc = acc + jnp.dot(p1_ref[2:H + 2, :], w1_ref[2], preferred_element_type=f32)
    out1 = acc + b1_ref[...]                                # (H, W*Co)
    # dropout: eval mode -> identity

    # ---- BN2 (folded) + ReLU into the second row-padded scratch ----
    p2_ref[1:H + 1, :] = jnp.maximum(out1 * s2_ref[...] + sh2_ref[...], 0.0)

    # ---- conv2: 3x3, pad=1, stride s.  W-stride lives inside the banded
    #      weights; H-stride uses strided row reads -> only Ho rows computed.
    def in_rows(dy):
        if stride == 1:
            return p2_ref[dy:dy + H, :]
        return p2_ref[pl.ds(dy, Ho, stride), :]

    acc = jnp.dot(in_rows(0), w2_ref[0], preferred_element_type=f32)
    acc = acc + jnp.dot(in_rows(1), w2_ref[1], preferred_element_type=f32)
    acc = acc + jnp.dot(in_rows(2), w2_ref[2], preferred_element_type=f32)
    out2 = acc + b2_ref[...]                                # (Ho, Wo*Co)

    # ---- shortcut + residual add ----
    if conv_shortcut:
        xs = x2d if stride == 1 else x_ref[pl.ds(0, Ho, stride), :]
        sc = jnp.dot(xs, ws_ref[...], preferred_element_type=f32) + bs_ref[...]
    else:
        sc = x2d            # identity shortcut (stride == 1 and Cin == Co)

    o_ref[...] = (out2 + sc).astype(o_ref.dtype)


# --------------------------------------------------------------------------
# Host-side weight preparation (built once, outside the kernel)
# --------------------------------------------------------------------------
def _conv_band_matrices(w_hwio, w_in, w_out, stride):
    """Fold the 3 dx taps, the zero padding in W, and the W-stride of a 3x3
    conv into banded matrices: (3, w_in*Cin, w_out*Co), one per dy tap."""
    _, _, cin, co = w_hwio.shape
    m = jnp.zeros((3, w_in * cin, w_out * co), w_hwio.dtype)
    for xo in range(w_out):
        for dx in range(3):
            u = xo * stride + dx - 1          # input column (padding = 1)
            if 0 <= u < w_in:                 # out-of-range taps hit zero pad
                m = m.at[:, u * cin:(u + 1) * cin,
                         xo * co:(xo + 1) * co].set(w_hwio[:, dx])
    return m


def _shortcut_band_matrix(ws, w_in, w_out, stride):
    """Block-diagonal matrix implementing the strided 1x1 shortcut conv in the
    lane-dense (H, W*C) layout: (w_in*Cin, w_out*Co)."""
    cin, co = ws.shape
    s = jnp.zeros((w_in * cin, w_out * co), ws.dtype)
    for xo in range(w_out):
        u = xo * stride
        s = s.at[u * cin:(u + 1) * cin, xo * co:(xo + 1) * co].set(ws)
    return s


# --------------------------------------------------------------------------
# WideBasic forward (wrapper / glue)
# --------------------------------------------------------------------------
def wide_basic_forward(x_nchw, params, in_planes, planes, stride):
    """Fused WideBasic forward (eval mode).  x_nchw: (N, Cin, H, W) float32."""
    N, Cin, H, W = x_nchw.shape
    assert Cin == in_planes
    Co = planes
    Ho = (H - 1) // stride + 1
    Wo = (W - 1) // stride + 1
    conv_shortcut = (stride != 1) or (in_planes != planes)

    # NCHW -> lane-dense (N, H, W*Cin)
    x2d = jnp.transpose(x_nchw, (0, 2, 3, 1)).reshape(N, H, W * Cin)

    # Fold BN (eval / running stats) into per-channel scale & shift, tiled
    # across W so they broadcast directly over the lane-dense layout.
    s1 = params["bn1_gamma"] * lax.rsqrt(params["bn1_var"] + _EPS)
    sh1 = params["bn1_beta"] - params["bn1_mean"] * s1
    s2 = params["bn2_gamma"] * lax.rsqrt(params["bn2_var"] + _EPS)
    sh2 = params["bn2_beta"] - params["bn2_mean"] * s2
    s1t, sh1t = jnp.tile(s1, W)[None, :], jnp.tile(sh1, W)[None, :]
    s2t, sh2t = jnp.tile(s2, W)[None, :], jnp.tile(sh2, W)[None, :]
    b1t = jnp.tile(params["b1"], W)[None, :]
    b2t = jnp.tile(params["b2"], Wo)[None, :]

    w1m = _conv_band_matrices(params["w1"], W, W, 1)          # (3, W*Cin, W*Co)
    w2m = _conv_band_matrices(params["w2"], W, Wo, stride)    # (3, W*Co, Wo*Co)

    args = [x2d, s1t, sh1t, w1m, b1t, s2t, sh2t, w2m, b2t]
    in_specs = [
        pl.BlockSpec((None, H, W * Cin), lambda n: (n, 0, 0)),
        pl.BlockSpec((1, W * Cin), lambda n: (0, 0)),
        pl.BlockSpec((1, W * Cin), lambda n: (0, 0)),
        pl.BlockSpec((3, W * Cin, W * Co), lambda n: (0, 0, 0)),
        pl.BlockSpec((1, W * Co), lambda n: (0, 0)),
        pl.BlockSpec((1, W * Co), lambda n: (0, 0)),
        pl.BlockSpec((1, W * Co), lambda n: (0, 0)),
        pl.BlockSpec((3, W * Co, Wo * Co), lambda n: (0, 0, 0)),
        pl.BlockSpec((1, Wo * Co), lambda n: (0, 0)),
    ]
    if conv_shortcut:
        args += [_shortcut_band_matrix(params["ws"], W, Wo, stride),
                 jnp.tile(params["bs"], Wo)[None, :]]
        in_specs += [
            pl.BlockSpec((W * Cin, Wo * Co), lambda n: (0, 0)),
            pl.BlockSpec((1, Wo * Co), lambda n: (0, 0)),
        ]

    kernel = functools.partial(_wide_basic_kernel, H=H, Ho=Ho, stride=stride,
                               conv_shortcut=conv_shortcut)

    out2d = pl.pallas_call(
        kernel,
        out_shape=jax.ShapeDtypeStruct((N, Ho, Wo * Co), jnp.float32),
        grid_spec=pltpu.PrefetchScalarGridSpec(
            num_scalar_prefetch=0,
            grid=(N,),
            in_specs=in_specs,
            out_specs=pl.BlockSpec((None, Ho, Wo * Co), lambda n: (n, 0, 0)),
            scratch_shapes=[
                pltpu.VMEM((H + 2, W * Cin), jnp.float32),
                pltpu.VMEM((H + 2, W * Co), jnp.float32),
            ],
        ),
        compiler_params=pltpu.CompilerParams(
            dimension_semantics=("parallel",)),   # batch-parallel (v7x megacore)
    )(*args)

    out = out2d.reshape(N, Ho, Wo, Co)          # un-flatten lanes
    return jnp.transpose(out, (0, 3, 1, 2))     # NHWC -> NCHW


# --------------------------------------------------------------------------
# Pure-JAX reference (same eval-mode semantics) for a numerical check
# --------------------------------------------------------------------------
def ref_forward(x_nchw, params, in_planes, planes, stride):
    x = jnp.transpose(x_nchw, (0, 2, 3, 1))
    dn = ("NHWC", "HWIO", "NHWC")

    def bn(v, g, b, m, var):
        return (v - m) / jnp.sqrt(var + _EPS) * g + b

    a1 = jnp.maximum(bn(x, params["bn1_gamma"], params["bn1_beta"],
                        params["bn1_mean"], params["bn1_var"]), 0.0)
    c1 = lax.conv_general_dilated(a1, params["w1"], (1, 1), ((1, 1), (1, 1)),
                                  dimension_numbers=dn,
                                  precision=lax.Precision.HIGHEST) + params["b1"]
    a2 = jnp.maximum(bn(c1, params["bn2_gamma"], params["bn2_beta"],
                        params["bn2_mean"], params["bn2_var"]), 0.0)
    c2 = lax.conv_general_dilated(a2, params["w2"], (stride, stride),
                                  ((1, 1), (1, 1)), dimension_numbers=dn,
                                  precision=lax.Precision.HIGHEST) + params["b2"]
    xs = x[:, ::stride, ::stride, :]
    if stride != 1 or in_planes != planes:
        sc = jnp.einsum("nhwc,cd->nhwd", xs, params["ws"],
                        precision=lax.Precision.HIGHEST) + params["bs"]
    else:
        sc = xs
    return jnp.transpose(c2 + sc, (0, 3, 1, 2))


def _make_params(key, cin, planes):
    ks = jax.random.split(key, 14)
    return dict(
        bn1_gamma=jax.random.uniform(ks[0], (cin,), minval=0.5, maxval=1.5),
        bn1_beta=0.1 * jax.random.normal(ks[1], (cin,)),
        bn1_mean=0.1 * jax.random.normal(ks[2], (cin,)),
        bn1_var=jax.random.uniform(ks[3], (cin,), minval=0.5, maxval=1.5),
        w1=0.1 * jax.random.normal(ks[4], (3, 3, cin, planes)),   # HWIO
        b1=0.1 * jax.random.normal(ks[5], (planes,)),
        bn2_gamma=jax.random.uniform(ks[6], (planes,), minval=0.5, maxval=1.5),
        bn2_beta=0.1 * jax.random.normal(ks[7], (planes,)),
        bn2_mean=0.1 * jax.random.normal(ks[8], (planes,)),
        bn2_var=jax.random.uniform(ks[9], (planes,), minval=0.5, maxval=1.5),
        w2=0.1 * jax.random.normal(ks[10], (3, 3, planes, planes)),
        b2=0.1 * jax.random.normal(ks[11], (planes,)),
        ws=0.1 * jax.random.normal(ks[12], (cin, planes)),        # 1x1 shortcut
        bs=0.1 * jax.random.normal(ks[13], (planes,)),
    )


if __name__ == "__main__":
    key = jax.random.PRNGKey(0)
    fwd = jax.jit(wide_basic_forward, static_argnums=(2, 3, 4))

    # config 1: WideBasic(in_planes=4, planes=8, dropout_rate=0.3, stride=1)
    #           (projection shortcut, since in_planes != planes)
    # config 2: in_planes == planes == 8, stride=1 (identity shortcut path)
    for cin, planes, stride in ((4, 8, 1), (8, 8, 1)):
        N, H, W = 2, 16, 16
        kx, kp, key = jax.random.split(key, 3)
        x = jax.random.normal(kx, (N, cin, H, W), jnp.float32)
        params = _make_params(kp, cin, planes)

        out = jax.block_until_ready(fwd(x, params, cin, planes, stride))
        ref = ref_forward(x, params, cin, planes, stride)
        assert out.shape == ref.shape, (out.shape, ref.shape)
        max_err = float(jnp.max(jnp.abs(out - ref)))
        # 1e-2 absolute tolerance on O(1) outputs: leaves headroom for possible
        # bf16 operand rounding inside the MXU while still catching any real
        # indexing / tap-alignment bug (those produce O(0.1-1) errors).
        assert max_err < 1e-2, f"max abs error too large: {max_err}"

    print("KERNEL_OK")
</pallas_src>

<mosaic_0001>
module attributes {stable_mosaic.version = 11 : i64} {
  func.func @_wide_basic_kernel(%arg0: i32, %arg1: memref<1x16x64xf32, #tpu.memory_space<vmem>>, %arg2: memref<1x64xf32, #tpu.memory_space<vmem>>, %arg3: memref<1x64xf32, #tpu.memory_space<vmem>>, %arg4: memref<3x64x128xf32, #tpu.memory_space<vmem>>, %arg5: memref<1x128xf32, #tpu.memory_space<vmem>>, %arg6: memref<1x128xf32, #tpu.memory_space<vmem>>, %arg7: memref<1x128xf32, #tpu.memory_space<vmem>>, %arg8: memref<3x128x128xf32, #tpu.memory_space<vmem>>, %arg9: memref<1x128xf32, #tpu.memory_space<vmem>>, %arg10: memref<64x128xf32, #tpu.memory_space<vmem>>, %arg11: memref<1x128xf32, #tpu.memory_space<vmem>>, %arg12: memref<1x16x128xf32, #tpu.memory_space<vmem>>, %arg13: memref<18x64xf32, #tpu.memory_space<vmem>>, %arg14: memref<18x128xf32, #tpu.memory_space<vmem>>) attributes {dimension_semantics = [#tpu.dimension_semantics<parallel>], iteration_bounds = array<i64: 2>, scalar_prefetch = 0 : i64, scratch_operands = 2 : i64, tpu.core_type = #tpu.core_type<tc>, window_params = [{transform_indices = @transform_0, window_bounds = array<i64: 1, 16, 64>}, {pipeline_mode = #tpu.pipeline_mode<synchronous>, transform_indices = @transform_1, window_bounds = array<i64: 1, 64>}, {pipeline_mode = #tpu.pipeline_mode<synchronous>, transform_indices = @transform_2, window_bounds = array<i64: 1, 64>}, {pipeline_mode = #tpu.pipeline_mode<synchronous>, transform_indices = @transform_3, window_bounds = array<i64: 3, 64, 128>}, {pipeline_mode = #tpu.pipeline_mode<synchronous>, transform_indices = @transform_4, window_bounds = array<i64: 1, 128>}, {pipeline_mode = #tpu.pipeline_mode<synchronous>, transform_indices = @transform_5, window_bounds = array<i64: 1, 128>}, {pipeline_mode = #tpu.pipeline_mode<synchronous>, transform_indices = @transform_6, window_bounds = array<i64: 1, 128>}, {pipeline_mode = #tpu.pipeline_mode<synchronous>, transform_indices = @transform_7, window_bounds = array<i64: 3, 128, 128>}, {pipeline_mode = #tpu.pipeline_mode<synchronous>, transform_indices = @transform_8, window_bounds = array<i64: 1, 128>}, {pipeline_mode = #tpu.pipeline_mode<synchronous>, transform_indices = @transform_9, window_bounds = array<i64: 64, 128>}, {pipeline_mode = #tpu.pipeline_mode<synchronous>, transform_indices = @transform_10, window_bounds = array<i64: 1, 128>}, {transform_indices = @transform_11, window_bounds = array<i64: 1, 16, 128>}]} {
    %cst = arith.constant 0.000000e+00 : f32
    %0 = vector.broadcast %cst : f32 to vector<1x64xf32>
    %c0 = arith.constant 0 : index
    %c0_0 = arith.constant 0 : index
    %1 = vector.load %arg13[%c0, %c0_0] : memref<18x64xf32, #tpu.memory_space<vmem>>, vector<1x64xf32>
    tpu.vector_store %arg13[%c0, %c0_0], %0 {strides = array<i32>} : memref<18x64xf32, #tpu.memory_space<vmem>>, vector<1x64xf32>,
    %cst_1 = arith.constant 0.000000e+00 : f32
    %2 = vector.broadcast %cst_1 : f32 to vector<1x64xf32>
    %c17 = arith.constant 17 : index
    %c0_2 = arith.constant 0 : index
    %3 = vector.load %arg13[%c17, %c0_2] : memref<18x64xf32, #tpu.memory_space<vmem>>, vector<1x64xf32>
    tpu.vector_store %arg13[%c17, %c0_2], %2 {strides = array<i32>} : memref<18x64xf32, #tpu.memory_space<vmem>>, vector<1x64xf32>,
    %cst_3 = arith.constant 0.000000e+00 : f32
    %4 = vector.broadcast %cst_3 : f32 to vector<1x128xf32>
    %c0_4 = arith.constant 0 : index
    %c0_5 = arith.constant 0 : index
    %5 = vector.load %arg14[%c0_4, %c0_5] : memref<18x128xf32, #tpu.memory_space<vmem>>, vector<1x128xf32>
    tpu.vector_store %arg14[%c0_4, %c0_5], %4 {strides = array<i32>} : memref<18x128xf32, #tpu.memory_space<vmem>>, vector<1x128xf32>,
    %cst_6 = arith.constant 0.000000e+00 : f32
    %6 = vector.broadcast %cst_6 : f32 to vector<1x128xf32>
    %c17_7 = arith.constant 17 : index
    %c0_8 = arith.constant 0 : index
    %7 = vector.load %arg14[%c17_7, %c0_8] : memref<18x128xf32, #tpu.memory_space<vmem>>, vector<1x128xf32>
    tpu.vector_store %arg14[%c17_7, %c0_8], %6 {strides = array<i32>} : memref<18x128xf32, #tpu.memory_space<vmem>>, vector<1x128xf32>,
    %c0_9 = arith.constant 0 : index
    %c0_10 = arith.constant 0 : index
    %c0_11 = arith.constant 0 : index
    %8 = vector.load %arg1[%c0_9, %c0_10, %c0_11] : memref<1x16x64xf32, #tpu.memory_space<vmem>>, vector<1x16x64xf32>
    %9 = vector.shape_cast %8 : vector<1x16x64xf32> to vector<16x64xf32>
    %c0_12 = arith.constant 0 : index
    %c0_13 = arith.constant 0 : index
    %10 = vector.load %arg2[%c0_12, %c0_13] : memref<1x64xf32, #tpu.memory_space<vmem>>, vector<1x64xf32>
    %11 = vector.broadcast %10 : vector<1x64xf32> to vector<16x64xf32>
    %12 = arith.mulf %9, %11 : vector<16x64xf32>
    %c0_14 = arith.constant 0 : index
    %c0_15 = arith.constant 0 : index
    %13 = vector.load %arg3[%c0_14, %c0_15] : memref<1x64xf32, #tpu.memory_space<vmem>>, vector<1x64xf32>
    %14 = vector.broadcast %13 : vector<1x64xf32> to vector<16x64xf32>
    %15 = arith.addf %12, %14 : vector<16x64xf32>
    %cst_16 = arith.constant 0.000000e+00 : f32
    %16 = vector.broadcast %cst_16 : f32 to vector<16x64xf32>
    %17 = arith.maximumf %15, %16 : vector<16x64xf32>
    %c1 = arith.constant 1 : index
    %c0_17 = arith.constant 0 : index
    %18 = vector.load %arg13[%c1, %c0_17] : memref<18x64xf32, #tpu.memory_space<vmem>>, vector<16x64xf32>
    tpu.vector_store %arg13[%c1, %c0_17], %17 {strides = array<i32>} : memref<18x64xf32, #tpu.memory_space<vmem>>, vector<16x64xf32>,
    %c0_18 = arith.constant 0 : index
    %c0_19 = arith.constant 0 : index
    %19 = vector.load %arg13[%c0_18, %c0_19] : memref<18x64xf32, #tpu.memory_space<vmem>>, vector<16x64xf32>
    %c0_20 = arith.constant 0 : index
    %c0_21 = arith.constant 0 : index
    %c0_22 = arith.constant 0 : index
    %20 = vector.load %arg4[%c0_20, %c0_21, %c0_22] : memref<3x64x128xf32, #tpu.memory_space<vmem>>, vector<1x64x128xf32>
    %21 = vector.shape_cast %20 : vector<1x64x128xf32> to vector<64x128xf32>
    %cst_23 = arith.constant dense<0.000000e+00> : vector<16x128xf32>
    %22 = tpu.matmul %19, %21, %cst_23 {dimension_numbers = #tpu.dot_dimension_numbers<[1], [0], [0], [1], [0, 0, 1, 1], [], []>} : vector<16x64xf32>, vector<64x128xf32>, vector<16x128xf32> -> vector<16x128xf32>
    %c1_24 = arith.constant 1 : index
    %c0_25 = arith.constant 0 : index
    %23 = vector.load %arg13[%c1_24, %c0_25] : memref<18x64xf32, #tpu.memory_space<vmem>>, vector<16x64xf32>
    %c1_26 = arith.constant 1 : index
    %c0_27 = arith.constant 0 : index
    %c0_28 = arith.constant 0 : index
    %24 = vector.load %arg4[%c1_26, %c0_27, %c0_28] : memref<3x64x128xf32, #tpu.memory_space<vmem>>, vector<1x64x128xf32>
    %25 = vector.shape_cast %24 : vector<1x64x128xf32> to vector<64x128xf32>
    %cst_29 = arith.constant dense<0.000000e+00> : vector<16x128xf32>
    %26 = tpu.matmul %23, %25, %cst_29 {dimension_numbers = #tpu.dot_dimension_numbers<[1], [0], [0], [1], [0, 0, 1, 1], [], []>} : vector<16x64xf32>, vector<64x128xf32>, vector<16x128xf32> -> vector<16x128xf32>
    %27 = arith.addf %22, %26 : vector<16x128xf32>
    %c2 = arith.constant 2 : index
    %c0_30 = arith.constant 0 : index
    %28 = vector.load %arg13[%c2, %c0_30] : memref<18x64xf32, #tpu.memory_space<vmem>>, vector<16x64xf32>
    %c2_31 = arith.constant 2 : index
    %c0_32 = arith.constant 0 : index
    %c0_33 = arith.constant 0 : index
    %29 = vector.load %arg4[%c2_31, %c0_32, %c0_33] : memref<3x64x128xf32, #tpu.memory_space<vmem>>, vector<1x64x128xf32>
    %30 = vector.shape_cast %29 : vector<1x64x128xf32> to vector<64x128xf32>
    %cst_34 = arith.constant dense<0.000000e+00> : vector<16x128xf32>
    %31 = tpu.matmul %28, %30, %cst_34 {dimension_numbers = #tpu.dot_dimension_numbers<[1], [0], [0], [1], [0, 0, 1, 1], [], []>} : vector<16x64xf32>, vector<64x128xf32>, vector<16x128xf32> -> vector<16x128xf32>
    %32 = arith.addf %27, %31 : vector<16x128xf32>
    %c0_35 = arith.constant 0 : index
    %c0_36 = arith.constant 0 : index
    %33 = vector.load %arg5[%c0_35, %c0_36] : memref<1x128xf32, #tpu.memory_space<vmem>>, vector<1x128xf32>
    %34 = vector.broadcast %33 : vector<1x128xf32> to vector<16x128xf32>
    %35 = arith.addf %32, %34 : vector<16x128xf32>
    %c0_37 = arith.constant 0 : index
    %c0_38 = arith.constant 0 : index
    %36 = vector.load %arg6[%c0_37, %c0_38] : memref<1x128xf32, #tpu.memory_space<vmem>>, vector<1x128xf32>
    %37 = vector.broadcast %36 : vector<1x128xf32> to vector<16x128xf32>
    %38 = arith.mulf %35, %37 : vector<16x128xf32>
    %c0_39 = arith.constant 0 : index
    %c0_40 = arith.constant 0 : index
    %39 = vector.load %arg7[%c0_39, %c0_40] : memref<1x128xf32, #tpu.memory_space<vmem>>, vector<1x128xf32>
    %40 = vector.broadcast %39 : vector<1x128xf32> to vector<16x128xf32>
    %41 = arith.addf %38, %40 : vector<16x128xf32>
    %cst_41 = arith.constant 0.000000e+00 : f32
    %42 = vector.broadcast %cst_41 : f32 to vector<16x128xf32>
    %43 = arith.maximumf %41, %42 : vector<16x128xf32>
    %c1_42 = arith.constant 1 : index
    %c0_43 = arith.constant 0 : index
    %44 = vector.load %arg14[%c1_42, %c0_43] : memref<18x128xf32, #tpu.memory_space<vmem>>, vector<16x128xf32>
    tpu.vector_store %arg14[%c1_42, %c0_43], %43 {strides = array<i32>} : memref<18x128xf32, #tpu.memory_space<vmem>>, vector<16x128xf32>,
    %c0_44 = arith.constant 0 : index
    %c0_45 = arith.constant 0 : index
    %45 = vector.load %arg14[%c0_44, %c0_45] : memref<18x128xf32, #tpu.memory_space<vmem>>, vector<16x128xf32>
    %c0_46 = arith.constant 0 : index
    %c0_47 = arith.constant 0 : index
    %c0_48 = arith.constant 0 : index
    %46 = vector.load %arg8[%c0_46, %c0_47, %c0_48] : memref<3x128x128xf32, #tpu.memory_space<vmem>>, vector<1x128x128xf32>
    %47 = vector.shape_cast %46 : vector<1x128x128xf32> to vector<128x128xf32>
    %cst_49 = arith.constant dense<0.000000e+00> : vector<16x128xf32>
    %48 = tpu.matmul %45, %47, %cst_49 {dimension_numbers = #tpu.dot_dimension_numbers<[1], [0], [0], [1], [0, 0, 1, 1], [], []>} : vector<16x128xf32>, vector<128x128xf32>, vector<16x128xf32> -> vector<16x128xf32>
    %c1_50 = arith.constant 1 : index
    %c0_51 = arith.constant 0 : index
    %49 = vector.load %arg14[%c1_50, %c0_51] : memref<18x128xf32, #tpu.memory_space<vmem>>, vector<16x128xf32>
    %c1_52 = arith.constant 1 : index
    %c0_53 = arith.constant 0 : index
    %c0_54 = arith.constant 0 : index
    %50 = vector.load %arg8[%c1_52, %c0_53, %c0_54] : memref<3x128x128xf32, #tpu.memory_space<vmem>>, vector<1x128x128xf32>
    %51 = vector.shape_cast %50 : vector<1x128x128xf32> to vector<128x128xf32>
    %cst_55 = arith.constant dense<0.000000e+00> : vector<16x128xf32>
    %52 = tpu.matmul %49, %51, %cst_55 {dimension_numbers = #tpu.dot_dimension_numbers<[1], [0], [0], [1], [0, 0, 1, 1], [], []>} : vector<16x128xf32>, vector<128x128xf32>, vector<16x128xf32> -> vector<16x128xf32>
    %53 = arith.addf %48, %52 : vector<16x128xf32>
    %c2_56 = arith.constant 2 : index
    %c0_57 = arith.constant 0 : index
    %54 = vector.load %arg14[%c2_56, %c0_57] : memref<18x128xf32, #tpu.memory_space<vmem>>, vector<16x128xf32>
    %c2_58 = arith.constant 2 : index
    %c0_59 = arith.constant 0 : index
    %c0_60 = arith.constant 0 : index
    %55 = vector.load %arg8[%c2_58, %c0_59, %c0_60] : memref<3x128x128xf32, #tpu.memory_space<vmem>>, vector<1x128x128xf32>
    %56 = vector.shape_cast %55 : vector<1x128x128xf32> to vector<128x128xf32>
    %cst_61 = arith.constant dense<0.000000e+00> : vector<16x128xf32>
    %57 = tpu.matmul %54, %56, %cst_61 {dimension_numbers = #tpu.dot_dimension_numbers<[1], [0], [0], [1], [0, 0, 1, 1], [], []>} : vector<16x128xf32>, vector<128x128xf32>, vector<16x128xf32> -> vector<16x128xf32>
    %58 = arith.addf %53, %57 : vector<16x128xf32>
    %c0_62 = arith.constant 0 : index
    %c0_63 = arith.constant 0 : index
    %59 = vector.load %arg9[%c0_62, %c0_63] : memref<1x128xf32, #tpu.memory_space<vmem>>, vector<1x128xf32>
    %60 = vector.broadcast %59 : vector<1x128xf32> to vector<16x128xf32>
    %61 = arith.addf %58, %60 : vector<16x128xf32>
    %c0_64 = arith.constant 0 : index
    %c0_65 = arith.constant 0 : index
    %62 = vector.load %arg10[%c0_64, %c0_65] : memref<64x128xf32, #tpu.memory_space<vmem>>, vector<64x128xf32>
    %cst_66 = arith.constant dense<0.000000e+00> : vector<16x128xf32>
    %63 = tpu.matmul %9, %62, %cst_66 {dimension_numbers = #tpu.dot_dimension_numbers<[1], [0], [0], [1], [0, 0, 1, 1], [], []>} : vector<16x64xf32>, vector<64x128xf32>, vector<16x128xf32> -> vector<16x128xf32>
    %c0_67 = arith.constant 0 : index
    %c0_68 = arith.constant 0 : index
    %64 = vector.load %arg11[%c0_67, %c0_68] : memref<1x128xf32, #tpu.memory_space<vmem>>, vector<1x128xf32>
    %65 = vector.broadcast %64 : vector<1x128xf32> to vector<16x128xf32>
    %66 = arith.addf %63, %65 : vector<16x128xf32>
    %67 = arith.addf %61, %66 : vector<16x128xf32>
    %c0_69 = arith.constant 0 : index
    %c0_70 = arith.constant 0 : index
    %c0_71 = arith.constant 0 : index
    %68 = vector.load %arg12[%c0_69, %c0_70, %c0_71] : memref<1x16x128xf32, #tpu.memory_space<vmem>>, vector<1x16x128xf32>
    %69 = vector.shape_cast %68 : vector<1x16x128xf32> to vector<16x128xf32>
    %70 = vector.shape_cast %67 : vector<16x128xf32> to vector<1x16x128xf32>
    tpu.vector_store %arg12[%c0_69, %c0_70, %c0_71], %70 {strides = array<i32>} : memref<1x16x128xf32, #tpu.memory_space<vmem>>, vector<1x16x128xf32>,
    return
  }
  func.func @transform_0(%arg0: i32) -> (i32, i32, i32) {
    %c0_i32 = arith.constant 0 : i32
    %c0_i32_0 = arith.constant 0 : i32
    %c0_i32_1 = arith.constant 0 : i32
    return %arg0, %c0_i32, %c0_i32_0 : i32, i32, i32
  }
  func.func @transform_1(%arg0: i32) -> (i32, i32) {
    %c0_i32 = arith.constant 0 : i32
    %c0_i32_0 = arith.constant 0 : i32
    %c0_i32_1 = arith.constant 0 : i32
    return %c0_i32, %c0_i32_0 : i32, i32
  }
  func.func @transform_2(%arg0: i32) -> (i32, i32) {
    %c0_i32 = arith.constant 0 : i32
    %c0_i32_0 = arith.constant 0 : i32
    %c0_i32_1 = arith.constant 0 : i32
    return %c0_i32, %c0_i32_0 : i32, i32
  }
  func.func @transform_3(%arg0: i32) -> (i32, i32, i32) {
    %c0_i32 = arith.constant 0 : i32
    %c0_i32_0 = arith.constant 0 : i32
    %c0_i32_1 = arith.constant 0 : i32
    %c0_i32_2 = arith.constant 0 : i32
    return %c0_i32, %c0_i32_0, %c0_i32_1 : i32, i32, i32
  }
  func.func @transform_4(%arg0: i32) -> (i32, i32) {
    %c0_i32 = arith.constant 0 : i32
    %c0_i32_0 = arith.constant 0 : i32
    %c0_i32_1 = arith.constant 0 : i32
    return %c0_i32, %c0_i32_0 : i32, i32
  }
  func.func @transform_5(%arg0: i32) -> (i32, i32) {
    %c0_i32 = arith.constant 0 : i32
    %c0_i32_0 = arith.constant 0 : i32
    %c0_i32_1 = arith.constant 0 : i32
    return %c0_i32, %c0_i32_0 : i32, i32
  }
  func.func @transform_6(%arg0: i32) -> (i32, i32) {
    %c0_i32 = arith.constant 0 : i32
    %c0_i32_0 = arith.constant 0 : i32
    %c0_i32_1 = arith.constant 0 : i32
    return %c0_i32, %c0_i32_0 : i32, i32
  }
  func.func @transform_7(%arg0: i32) -> (i32, i32, i32) {
    %c0_i32 = arith.constant 0 : i32
    %c0_i32_0 = arith.constant 0 : i32
    %c0_i32_1 = arith.constant 0 : i32
    %c0_i32_2 = arith.constant 0 : i32
    return %c0_i32, %c0_i32_0, %c0_i32_1 : i32, i32, i32
  }
  func.func @transform_8(%arg0: i32) -> (i32, i32) {
    %c0_i32 = arith.constant 0 : i32
    %c0_i32_0 = arith.constant 0 : i32
    %c0_i32_1 = arith.constant 0 : i32
    return %c0_i32, %c0_i32_0 : i32, i32
  }
  func.func @transform_9(%arg0: i32) -> (i32, i32) {
    %c0_i32 = arith.constant 0 : i32
    %c0_i32_0 = arith.constant 0 : i32
    %c0_i32_1 = arith.constant 0 : i32
    return %c0_i32, %c0_i32_0 : i32, i32
  }
  func.func @transform_10(%arg0: i32) -> (i32, i32) {
    %c0_i32 = arith.constant 0 : i32
    %c0_i32_0 = arith.constant 0 : i32
    %c0_i32_1 = arith.constant 0 : i32
    return %c0_i32, %c0_i32_0 : i32, i32
  }
  func.func @transform_11(%arg0: i32) -> (i32, i32, i32) {
    %c0_i32 = arith.constant 0 : i32
    %c0_i32_0 = arith.constant 0 : i32
    %c0_i32_1 = arith.constant 0 : i32
    return %arg0, %c0_i32, %c0_i32_0 : i32, i32, i32
  }
}

</mosaic_0001>

<llo_original>
// kernel: tile.38
$region0: #{tile.38}
  #allocation0 [shape = 's32[1]{0}', space=sflag, size = 0x4, scoped, tag = 'scoped memory for tile.38']
  %s0 = inlined_call_operand.vmem [shape: f32[4], index: 0, kind: input, shape index: {}]
  %s1 = inlined_call_operand.vmem [shape: f32[16,4], index: 1, kind: output, shape index: {}]
  // Predicated region
  $region2: #{tile.38} parent=0 // pred_check
    _
  $region3: #{tile.38} parent=0 // pred_check_branch
    %3 = sbr.rel (0) target = $region5
  $region4: #{tile.38} parent=0 // pred_region
    _
  $region5: #{tile.38} parent=0 // pred_fallthru
    _
  %v4 = vld [vmem:[%s0] ss:$0 sm:$0xff]
  %5 = vst [vmem:[%s1] sm:$0xff] %v4
  %s6 = scalar_lea.vmem %s1, 8
  %7 = vst [vmem:[%s6] sm:$0xff] %v4

// kernel: tile.39
$region0: #{tile.39}
  %s0 = inlined_call_operand.vmem [shape: f32[16,4], index: 0, kind: input, shape index: {}]
  %s1 = inlined_call_operand.vmem [shape: f32[1,64], index: 1, kind: output, shape index: {}]
  $region1: #{tile.39} parent=0
    #allocation0 [shape = 'u8[4096]{0}', space=vmem, size = 0x1000, scoped, tag = 'scoped mem for output reshape']
    %v2 = vld [vmem:[%s0] sm:$0x1]
    %vm3 = vcmask 31744
    %4 = vst.msk [vmem:[#allocation0] sm:$0x1] %vm3, %v2
    %s5 = scalar_lea.vmem %s0, 15
    %v6 = vld [vmem:[%s5] sm:$0x1]
    %7 = vrot.lane.b32.xlu0 %v6, 60
    %v8 = vpop.permute.xlu0 %7
    %vm9 = vcmask 523744
    %10 = vst.msk [vmem:[#allocation0] sm:$0x1] %vm9, %v8
    %s11 = scalar_lea.vmem %s0, 14
    %v12 = vld [vmem:[%s11] sm:$0x1]
    %13 = vrot.lane.b32.xlu0 %v12, 56
    %v14 = vpop.permute.xlu0 %13
    %vm15 = vcmask 490944
    %16 = vst.msk [vmem:[#allocation0] sm:$0x1] %vm15, %v14
    %s17 = scalar_lea.vmem %s0, 13
    %v18 = vld [vmem:[%s17] sm:$0x1]
    %19 = vrot.lane.b32.xlu0 %v18, 52
    %v20 = vpop.permute.xlu0 %19
    %vm21 = vcmask 458144
    %22 = vst.msk [vmem:[#allocation0] sm:$0x1] %vm21, %v20
    %s23 = scalar_lea.vmem %s0, 12
    %v24 = vld [vmem:[%s23] sm:$0x1]
    %25 = vrot.lane.b32.xlu0 %v24, 48
    %v26 = vpop.permute.xlu0 %25
    %vm27 = vcmask 425344
    %28 = vst.msk [vmem:[#allocation0] sm:$0x1] %vm27, %v26
    %s29 = scalar_lea.vmem %s0, 11
    %v30 = vld [vmem:[%s29] sm:$0x1]
    %31 = vrot.lane.b32.xlu0 %v30, 44
    %v32 = vpop.permute.xlu0 %31
    %vm33 = vcmask 392544
    %34 = vst.msk [vmem:[#allocation0] sm:$0x1] %vm33, %v32
    %s35 = scalar_lea.vmem %s0, 10
    %v36 = vld [vmem:[%s35] sm:$0x1]
    %37 = vrot.lane.b32.xlu0 %v36, 40
    %v38 = vpop.permute.xlu0 %37
    %vm39 = vcmask 359744
    %40 = vst.msk [vmem:[#allocation0] sm:$0x1] %vm39, %v38
    %s41 = scalar_lea.vmem %s0, 9
    %v42 = vld [vmem:[%s41] sm:$0x1]
    %43 = vrot.lane.b32.xlu0 %v42, 36
    %v44 = vpop.permute.xlu0 %43
    %vm45 = vcmask 326944
    %46 = vst.msk [vmem:[#allocation0] sm:$0x1] %vm45, %v44
    %s47 = scalar_lea.vmem %s0, 8
    %v48 = vld [vmem:[%s47] sm:$0x1]
    %49 = vrot.lane.b32.xlu0 %v48, 32
    %v50 = vpop.permute.xlu0 %49
    %vm51 = vcmask 294144
    %52 = vst.msk [vmem:[#allocation0] sm:$0x1] %vm51, %v50
    %s53 = scalar_lea.vmem %s0, 7
    %v54 = vld [vmem:[%s53] sm:$0x1]
    %55 = vrot.lane.b32.xlu0 %v54, 28
    %v56 = vpop.permute.xlu0 %55
    %vm57 = vcmask 261344
    %58 = vst.msk [vmem:[#allocation0] sm:$0x1] %vm57, %v56
    %s59 = scalar_lea.vmem %s0, 6
    %v60 = vld [vmem:[%s59] sm:$0x1]
    %61 = vrot.lane.b32.xlu0 %v60, 24
    %v62 = vpop.permute.xlu0 %61
    %vm63 = vcmask 228544
    %64 = vst.msk [vmem:[#allocation0] sm:$0x1] %vm63, %v62
    %s65 = scalar_lea.vmem %s0, 5
    %v66 = vld [vmem:[%s65] sm:$0x1]
    %67 = vrot.lane.b32.xlu0 %v66, 20
    %v68 = vpop.permute.xlu0 %67
    %vm69 = vcmask 195744
    %70 = vst.msk [vmem:[#allocation0] sm:$0x1] %vm69, %v68
    %s71 = scalar_lea.vmem %s0, 4
    %v72 = vld [vmem:[%s71] sm:$0x1]
    %73 = vrot.lane.b32.xlu0 %v72, 16
    %v74 = vpop.permute.xlu0 %73
    %vm75 = vcmask 162944
    %76 = vst.msk [vmem:[#allocation0] sm:$0x1] %vm75, %v74
    %s77 = scalar_lea.vmem %s0, 3
    %v78 = vld [vmem:[%s77] sm:$0x1]
    %79 = vrot.lane.b32.xlu0 %v78, 12
    %v80 = vpop.permute.xlu0 %79
    %vm81 = vcmask 130144
    %82 = vst.msk [vmem:[#allocation0] sm:$0x1] %vm81, %v80
    %s83 = scalar_lea.vmem %s0, 2
    %v84 = vld [vmem:[%s83] sm:$0x1]
    %85 = vrot.lane.b32.xlu0 %v84, 8
    %v86 = vpop.permute.xlu0 %85
    %vm87 = vcmask 97344
    %88 = vst.msk [vmem:[#allocation0] sm:$0x1] %vm87, %v86
    %s89 = scalar_lea.vmem %s0, 1
    %v90 = vld [vmem:[%s89] sm:$0x1]
    %91 = vrot.lane.b32.xlu0 %v90, 4
    %v92 = vpop.permute.xlu0 %91
    %vm93 = vcmask 64544
    %94 = vst.msk [vmem:[#allocation0] sm:$0x1] %vm93, %v92
    %s96 = sshllo.u32 0, 1
    %v98 = vld [vmem:[#allocation0] sm:%s96]
    %s99 = sshllo.u32 0, 1
    %100 = vst [vmem:[%s1] sm:%s99] %v98

// kernel: tile.48
$region0: #{tile.48}
  #allocation0 [shape = 's32[1]{0}', space=sflag, size = 0x4, scoped, tag = 'scoped memory for tile.48']
  %s0 = inlined_call_operand.vmem [shape: f32[8], index: 0, kind: input, shape index: {}]
  %s1 = inlined_call_operand.vmem [shape: f32[16,8], index: 1, kind: output, shape index: {}]
  // Predicated region
  $region2: #{tile.48} parent=0 // pred_check
    _
  $region3: #{tile.48} parent=0 // pred_check_branch
    %3 = sbr.rel (0) target = $region5
  $region4: #{tile.48} parent=0 // pred_region
    _
  $region5: #{tile.48} parent=0 // pred_fallthru
    _
  %v4 = vld [vmem:[%s0] ss:$0 sm:$0xff]
  %5 = vst [vmem:[%s1] sm:$0xff] %v4
  %s6 = scalar_lea.vmem %s1, 8
  %7 = vst [vmem:[%s6] sm:$0xff] %v4

// kernel: tile.49
$region0: #{tile.49}
  %s0 = inlined_call_operand.vmem [shape: f32[16,8], index: 0, kind: input, shape index: {}]
  %s1 = inlined_call_operand.vmem [shape: f32[1,128], index: 1, kind: output, shape index: {}]
  $region1: #{tile.49} parent=0
    #allocation0 [shape = 'u8[4096]{0}', space=vmem, size = 0x1000, scoped, tag = 'scoped mem for output reshape']
    %v2 = vld [vmem:[%s0] sm:$0x1]
    %vm3 = vcmask 64512
    %4 = vst.msk [vmem:[#allocation0] sm:$0x1] %vm3, %v2
    %s5 = scalar_lea.vmem %s0, 15
    %v6 = vld [vmem:[%s5] sm:$0x1]
    %7 = vrot.lane.b32.xlu0 %v6, 120
    %v8 = vpop.permute.xlu0 %7
    %vm9 = vcmask 1048512
    %10 = vst.msk [vmem:[#allocation0] sm:$0x1] %vm9, %v8
    %s11 = scalar_lea.vmem %s0, 14
    %v12 = vld [vmem:[%s11] sm:$0x1]
    %13 = vrot.lane.b32.xlu0 %v12, 112
    %v14 = vpop.permute.xlu0 %13
    %vm15 = vcmask 982912
    %16 = vst.msk [vmem:[#allocation0] sm:$0x1] %vm15, %v14
    %s17 = scalar_lea.vmem %s0, 13
    %v18 = vld [vmem:[%s17] sm:$0x1]
    %19 = vrot.lane.b32.xlu0 %v18, 104
    %v20 = vpop.permute.xlu0 %19
    %vm21 = vcmask 917312
    %22 = vst.msk [vmem:[#allocation0] sm:$0x1] %vm21, %v20
    %s23 = scalar_lea.vmem %s0, 12
    %v24 = vld [vmem:[%s23] sm:$0x1]
    %25 = vrot.lane.b32.xlu0 %v24, 96
    %v26 = vpop.permute.xlu0 %25
    %vm27 = vcmask 851712
    %28 = vst.msk [vmem:[#allocation0] sm:$0x1] %vm27, %v26
    %s29 = scalar_lea.vmem %s0, 11
    %v30 = vld [vmem:[%s29] sm:$0x1]
    %31 = vrot.lane.b32.xlu0 %v30, 88
    %v32 = vpop.permute.xlu0 %31
    %vm33 = vcmask 786112
    %34 = vst.msk [vmem:[#allocation0] sm:$0x1] %vm33, %v32
    %s35 = scalar_lea.vmem %s0, 10
    %v36 = vld [vmem:[%s35] sm:$0x1]
    %37 = vrot.lane.b32.xlu0 %v36, 80
    %v38 = vpop.permute.xlu0 %37
    %vm39 = vcmask 720512
    %40 = vst.msk [vmem:[#allocation0] sm:$0x1] %vm39, %v38
    %s41 = scalar_lea.vmem %s0, 9
    %v42 = vld [vmem:[%s41] sm:$0x1]
    %43 = vrot.lane.b32.xlu0 %v42, 72
    %v44 = vpop.permute.xlu0 %43
    %vm45 = vcmask 654912
    %46 = vst.msk [vmem:[#allocation0] sm:$0x1] %vm45, %v44
    %s47 = scalar_lea.vmem %s0, 8
    %v48 = vld [vmem:[%s47] sm:$0x1]
    %49 = vrot.lane.b32.xlu0 %v48, 64
    %v50 = vpop.permute.xlu0 %49
    %vm51 = vcmask 589312
    %52 = vst.msk [vmem:[#allocation0] sm:$0x1] %vm51, %v50
    %s53 = scalar_lea.vmem %s0, 7
    %v54 = vld [vmem:[%s53] sm:$0x1]
    %55 = vrot.lane.b32.xlu0 %v54, 56
    %v56 = vpop.permute.xlu0 %55
    %vm57 = vcmask 523712
    %58 = vst.msk [vmem:[#allocation0] sm:$0x1] %vm57, %v56
    %s59 = scalar_lea.vmem %s0, 6
    %v60 = vld [vmem:[%s59] sm:$0x1]
    %61 = vrot.lane.b32.xlu0 %v60, 48
    %v62 = vpop.permute.xlu0 %61
    %vm63 = vcmask 458112
    %64 = vst.msk [vmem:[#allocation0] sm:$0x1] %vm63, %v62
    %s65 = scalar_lea.vmem %s0, 5
    %v66 = vld [vmem:[%s65] sm:$0x1]
    %67 = vrot.lane.b32.xlu0 %v66, 40
    %v68 = vpop.permute.xlu0 %67
    %vm69 = vcmask 392512
    %70 = vst.msk [vmem:[#allocation0] sm:$0x1] %vm69, %v68
    %s71 = scalar_lea.vmem %s0, 4
    %v72 = vld [vmem:[%s71] sm:$0x1]
    %73 = vrot.lane.b32.xlu0 %v72, 32
    %v74 = vpop.permute.xlu0 %73
    %vm75 = vcmask 326912
    %76 = vst.msk [vmem:[#allocation0] sm:$0x1] %vm75, %v74
    %s77 = scalar_lea.vmem %s0, 3
    %v78 = vld [vmem:[%s77] sm:$0x1]
    %79 = vrot.lane.b32.xlu0 %v78, 24
    %v80 = vpop.permute.xlu0 %79
    %vm81 = vcmask 261312
    %82 = vst.msk [vmem:[#allocation0] sm:$0x1] %vm81, %v80
    %s83 = scalar_lea.vmem %s0, 2
    %v84 = vld [vmem:[%s83] sm:$0x1]
    %85 = vrot.lane.b32.xlu0 %v84, 16
    %v86 = vpop.permute.xlu0 %85
    %vm87 = vcmask 195712
    %88 = vst.msk [vmem:[#allocation0] sm:$0x1] %vm87, %v86
    %s89 = scalar_lea.vmem %s0, 1
    %v90 = vld [vmem:[%s89] sm:$0x1]
    %91 = vrot.lane.b32.xlu0 %v90, 8
    %v92 = vpop.permute.xlu0 %91
    %vm93 = vcmask 130112
    %94 = vst.msk [vmem:[#allocation0] sm:$0x1] %vm93, %v92
    %s96 = sshllo.u32 0, 1
    %v98 = vld [vmem:[#allocation0] sm:%s96]
    %s99 = sshllo.u32 0, 1
    %100 = vst [vmem:[%s1] sm:%s99] %v98

// kernel: wide_basic_forward.1
$region0: #{wide_basic_forward.1}
  #allocation0 [shape = 'u32[]', space=smem, size = 0x4, offset = 0x4, fixed_abs, tag = 'smem constant byte address 0x4 - core index']
  #allocation1 [shape = 'u32[144,128]{1,0:T(1,128)}', space=vmem, size = 0x12000, scoped, tag = 'internal scratch']
  #allocation2 [shape = 'f32[18,64]{1,0:T(8,128)}', space=vmem, size = 0x3000, scoped, tag = 'scratch operand']
  #allocation3 [shape = 'f32[18,128]{1,0:T(8,128)}', space=vmem, size = 0x3000, scoped, tag = 'scratch operand']
  %s0 = inlined_call_operand.vmem [shape: f32[2,16,64], index: 0, kind: input, shape index: {}]
  %s1 = inlined_call_operand.vmem [shape: f32[1,64], index: 1, kind: input, shape index: {}]
  %s2 = inlined_call_operand.vmem [shape: f32[1,64], index: 2, kind: input, shape index: {}]
  %s3 = inlined_call_operand.vmem [shape: f32[3,64,128], index: 3, kind: input, shape index: {}]
  %s4 = inlined_call_operand.vmem [shape: f32[1,128], index: 4, kind: input, shape index: {}]
  %s5 = inlined_call_operand.vmem [shape: f32[1,128], index: 5, kind: input, shape index: {}]
  %s6 = inlined_call_operand.vmem [shape: f32[1,128], index: 6, kind: input, shape index: {}]
  %s7 = inlined_call_operand.vmem [shape: f32[3,128,128], index: 7, kind: input, shape index: {}]
  %s8 = inlined_call_operand.vmem [shape: f32[1,128], index: 8, kind: input, shape index: {}]
  %s9 = inlined_call_operand.vmem [shape: f32[64,128], index: 9, kind: input, shape index: {}]
  %s10 = inlined_call_operand.vmem [shape: f32[1,128], index: 10, kind: input, shape index: {}]
  %s11 = inlined_call_operand.vmem [shape: f32[2,16,128], index: 11, kind: output, shape index: {}]
  %s12 = sld [smem:[#allocation0]]
  $region77: #{wide_basic_forward.1} parent=0
    _
  %s14 = ssub.s32 1, %s12
  %s15 = scalar_select 0, %s14, %s12
  loop: start=0, step=1, limit=4
  $region2: #{wide_basic_forward.1} parent=0 // loop_pre_header
    _
  $region3: #{wide_basic_forward.1} parent=0 // loop_header
    %s17 = sphi 0, %s21
    %p18 = scmp.ge.s32.totalorder %s17, 4
    %s27 = sphi 0, %s29
    %s30 = sphi 0, %s27
    %s31 = sphi 0, %s30
    %s47 = sphi 0, %s31
    %s51 = sphi 0, %s51
    %s53 = sphi 0, %s51
    %s54 = sphi 0, %s53
    %s68 = sphi 0, %s54
    %s72 = sphi 0, %s72
    %s74 = sphi 0, %s72
    %s75 = sphi 0, %s74
    %s89 = sphi 0, %s75
    %s93 = sphi 0, %s93
    %s95 = sphi 0, %s93
    %s96 = sphi 0, %s95
    %s110 = sphi 0, %s96
    %s114 = sphi 0, %s114
    %s116 = sphi 0, %s114
    %s117 = sphi 0, %s116
    %s131 = sphi 0, %s117
    %s135 = sphi 0, %s135
    %s137 = sphi 0, %s135
    %s138 = sphi 0, %s137
    %s152 = sphi 0, %s138
    %s156 = sphi 0, %s156
    %s158 = sphi 0, %s156
    %s159 = sphi 0, %s158
    %s173 = sphi 0, %s159
    %s177 = sphi 0, %s177
    %s179 = sphi 0, %s177
    %s180 = sphi 0, %s179
    %s194 = sphi 0, %s180
    %s198 = sphi 0, %s198
    %s200 = sphi 0, %s198
    %s201 = sphi 0, %s200
    %s215 = sphi 0, %s201
    %s219 = sphi 0, %s219
    %s221 = sphi 0, %s219
    %s222 = sphi 0, %s221
    %s236 = sphi 0, %s222
    %s240 = sphi 0, %s240
    %s242 = sphi 0, %s240
    %s243 = sphi 0, %s242
    %s257 = sphi 0, %s243
    %s263 = sphi 0, %s265
    %s266 = sphi 0, %s263
    %s267 = sphi 0, %s266
    %s283 = sphi 0, %s267
  $region4: #{wide_basic_forward.1} parent=0 // loop_header_branch
    %20 = sbr.rel (%p18) target = $region8
  $region5: #{wide_basic_forward.1} parent=0 // loop_body
    %s22 = ssub.s32 %s17, 1
    %s23 = ssub.s32 %s17, 2
    %s24 = sadd.s32 %s17, 1
    %s25 = ssub.s32 %s17, %s24
    %p26 = scmp.eq.s32.totalorder %s25, 0
    %s28 = sadd.s32 %s27, 1
    %s29 = scalar_select %p26, %s27, %s28
    %p32 = pneg %p26
    %p33 = scmp.eq.s32.totalorder %s17, 1
    %p34 = por %p32, %p33
    %p35 = scmp.ne.s32.totalorder %s27, %s30
    %p36 = scmp.eq.s32.totalorder %s17, 0
    %p37 = por %p35, %p36
    %p38 = scmp.ne.s32.totalorder %s27, %s30
    %p39 = scmp.eq.s32.totalorder %s22, 1
    %p40 = por %p38, %p39
    %p41 = scmp.ne.s32.totalorder %s30, %s31
    %p42 = scmp.eq.s32.totalorder %s22, 0
    %p43 = por %p41, %p42
    %p44 = scmp.ne.s32.totalorder %s30, %s31
    %p45 = scmp.eq.s32.totalorder %s23, 1
    %p46 = por %p44, %p45
    %p48 = scmp.ne.s32.totalorder %s31, %s47
    %p49 = scmp.eq.s32.totalorder %s23, 0
    %p50 = por %p48, %p49
    %s52 = sadd.s32 %s51, 1
    %p55 = scmp.eq.s32.totalorder %s17, 1
    %p56 = scmp.ne.s32.totalorder %s51, %s53
    %p57 = scmp.eq.s32.totalorder %s17, 0
    %p58 = por %p56, %p57
    %p59 = scmp.ne.s32.totalorder %s51, %s53
    %p60 = scmp.eq.s32.totalorder %s22, 1
    %p61 = por %p59, %p60
    %p62 = scmp.ne.s32.totalorder %s53, %s54
    %p63 = scmp.eq.s32.totalorder %s22, 0
    %p64 = por %p62, %p63
    %p65 = scmp.ne.s32.totalorder %s53, %s54
    %p66 = scmp.eq.s32.totalorder %s23, 1
    %p67 = por %p65, %p66
    %p69 = scmp.ne.s32.totalorder %s54, %s68
    %p70 = scmp.eq.s32.totalorder %s23, 0
    %p71 = por %p69, %p70
    %s73 = sadd.s32 %s72, 1
    %p76 = scmp.eq.s32.totalorder %s17, 1
    %p77 = scmp.ne.s32.totalorder %s72, %s74
    %p78 = scmp.eq.s32.totalorder %s17, 0
    %p79 = por %p77, %p78
    %p80 = scmp.ne.s32.totalorder %s72, %s74
    %p81 = scmp.eq.s32.totalorder %s22, 1
    %p82 = por %p80, %p81
    %p83 = scmp.ne.s32.totalorder %s74, %s75
    %p84 = scmp.eq.s32.totalorder %s22, 0
    %p85 = por %p83, %p84
    %p86 = scmp.ne.s32.totalorder %s74, %s75
    %p87 = scmp.eq.s32.totalorder %s23, 1
    %p88 = por %p86, %p87
    %p90 = scmp.ne.s32.totalorder %s75, %s89
    %p91 = scmp.eq.s32.totalorder %s23, 0
    %p92 = por %p90, %p91
    %s94 = sadd.s32 %s93, 1
    %p97 = scmp.eq.s32.totalorder %s17, 1
    %p98 = scmp.ne.s32.totalorder %s93, %s95
    %p99 = scmp.eq.s32.totalorder %s17, 0
    %p100 = por %p98, %p99
    %p101 = scmp.ne.s32.totalorder %s93, %s95
    %p102 = scmp.eq.s32.totalorder %s22, 1
    %p103 = por %p101, %p102
    %p104 = scmp.ne.s32.totalorder %s95, %s96
    %p105 = scmp.eq.s32.totalorder %s22, 0
    %p106 = por %p104, %p105
    %p107 = scmp.ne.s32.totalorder %s95, %s96
    %p108 = scmp.eq.s32.totalorder %s23, 1
    %p109 = por %p107, %p108
    %p111 = scmp.ne.s32.totalorder %s96, %s110
    %p112 = scmp.eq.s32.totalorder %s23, 0
    %p113 = por %p111, %p112
    %s115 = sadd.s32 %s114, 1
    %p118 = scmp.eq.s32.totalorder %s17, 1
    %p119 = scmp.ne.s32.totalorder %s114, %s116
    %p120 = scmp.eq.s32.totalorder %s17, 0
    %p121 = por %p119, %p120
    %p122 = scmp.ne.s32.totalorder %s114, %s116
    %p123 = scmp.eq.s32.totalorder %s22, 1
    %p124 = por %p122, %p123
    %p125 = scmp.ne.s32.totalorder %s116, %s117
    %p126 = scmp.eq.s32.totalorder %s22, 0
    %p127 = por %p125, %p126
    %p128 = scmp.ne.s32.totalorder %s116, %s117
    %p129 = scmp.eq.s32.totalorder %s23, 1
    %p130 = por %p128, %p129
    %p132 = scmp.ne.s32.totalorder %s117, %s131
    %p133 = scmp.eq.s32.totalorder %s23, 0
    %p134 = por %p132, %p133
    %s136 = sadd.s32 %s135, 1
    %p139 = scmp.eq.s32.totalorder %s17, 1
    %p140 = scmp.ne.s32.totalorder %s135, %s137
    %p141 = scmp.eq.s32.totalorder %s17, 0
    %p142 = por %p140, %p141
    %p143 = scmp.ne.s32.totalorder %s135, %s137
    %p144 = scmp.eq.s32.totalorder %s22, 1
    %p145 = por %p143, %p144
    %p146 = scmp.ne.s32.totalorder %s137, %s138
    %p147 = scmp.eq.s32.totalorder %s22, 0
    %p148 = por %p146, %p147
    %p149 = scmp.ne.s32.totalorder %s137, %s138
    %p150 = scmp.eq.s32.totalorder %s23, 1
    %p151 = por %p149, %p150
    %p153 = scmp.ne.s32.totalorder %s138, %s152
    %p154 = scmp.eq.s32.totalorder %s23, 0
    %p155 = por %p153, %p154
    %s157 = sadd.s32 %s156, 1
    %p160 = scmp.eq.s32.totalorder %s17, 1
    %p161 = scmp.ne.s32.totalorder %s156, %s158
    %p162 = scmp.eq.s32.totalorder %s17, 0
    %p163 = por %p161, %p162
    %p164 = scmp.ne.s32.totalorder %s156, %s158
    %p165 = scmp.eq.s32.totalorder %s22, 1
    %p166 = por %p164, %p165
    %p167 = scmp.ne.s32.totalorder %s158, %s159
    %p168 = scmp.eq.s32.totalorder %s22, 0
    %p169 = por %p167, %p168
    %p170 = scmp.ne.s32.totalorder %s158, %s159
    %p171 = scmp.eq.s32.totalorder %s23, 1
    %p172 = por %p170, %p171
    %p174 = scmp.ne.s32.totalorder %s159, %s173
    %p175 = scmp.eq.s32.totalorder %s23, 0
    %p176 = por %p174, %p175
    %s178 = sadd.s32 %s177, 1
    %p181 = scmp.eq.s32.totalorder %s17, 1
    %p182 = scmp.ne.s32.totalorder %s177, %s179
    %p183 = scmp.eq.s32.totalorder %s17, 0
    %p184 = por %p182, %p183
    %p185 = scmp.ne.s32.totalorder %s177, %s179
    %p186 = scmp.eq.s32.totalorder %s22, 1
    %p187 = por %p185, %p186
    %p188 = scmp.ne.s32.totalorder %s179, %s180
    %p189 = scmp.eq.s32.totalorder %s22, 0
    %p190 = por %p188, %p189
    %p191 = scmp.ne.s32.totalorder %s179, %s180
    %p192 = scmp.eq.s32.totalorder %s23, 1
    %p193 = por %p191, %p192
    %p195 = scmp.ne.s32.totalorder %s180, %s194
    %p196 = scmp.eq.s32.totalorder %s23, 0
    %p197 = por %p195, %p196
    %s199 = sadd.s32 %s198, 1
    %p202 = scmp.eq.s32.totalorder %s17, 1
    %p203 = scmp.ne.s32.totalorder %s198, %s200
    %p204 = scmp.eq.s32.totalorder %s17, 0
    %p205 = por %p203, %p204
    %p206 = scmp.ne.s32.totalorder %s198, %s200
    %p207 = scmp.eq.s32.totalorder %s22, 1
    %p208 = por %p206, %p207
    %p209 = scmp.ne.s32.totalorder %s200, %s201
    %p210 = scmp.eq.s32.totalorder %s22, 0
    %p211 = por %p209, %p210
    %p212 = scmp.ne.s32.totalorder %s200, %s201
    %p213 = scmp.eq.s32.totalorder %s23, 1
    %p214 = por %p212, %p213
    %p216 = scmp.ne.s32.totalorder %s201, %s215
    %p217 = scmp.eq.s32.totalorder %s23, 0
    %p218 = por %p216, %p217
    %s220 = sadd.s32 %s219, 1
    %p223 = scmp.eq.s32.totalorder %s17, 1
    %p224 = scmp.ne.s32.totalorder %s219, %s221
    %p225 = scmp.eq.s32.totalorder %s17, 0
    %p226 = por %p224, %p225
    %p227 = scmp.ne.s32.totalorder %s219, %s221
    %p228 = scmp.eq.s32.totalorder %s22, 1
    %p229 = por %p227, %p228
    %p230 = scmp.ne.s32.totalorder %s221, %s222
    %p231 = scmp.eq.s32.totalorder %s22, 0
    %p232 = por %p230, %p231
    %p233 = scmp.ne.s32.totalorder %s221, %s222
    %p234 = scmp.eq.s32.totalorder %s23, 1
    %p235 = por %p233, %p234
    %p237 = scmp.ne.s32.totalorder %s222, %s236
    %p238 = scmp.eq.s32.totalorder %s23, 0
    %p239 = por %p237, %p238
    %s241 = sadd.s32 %s240, 1
    %p244 = scmp.eq.s32.totalorder %s17, 1
    %p245 = scmp.ne.s32.totalorder %s240, %s242
    %p246 = scmp.eq.s32.totalorder %s17, 0
    %p247 = por %p245, %p246
    %p248 = scmp.ne.s32.totalorder %s240, %s242
    %p249 = scmp.eq.s32.totalorder %s22, 1
    %p250 = por %p248, %p249
    %p251 = scmp.ne.s32.totalorder %s242, %s243
    %p252 = scmp.eq.s32.totalorder %s22, 0
    %p253 = por %p251, %p252
    %p254 = scmp.ne.s32.totalorder %s242, %s243
    %p255 = scmp.eq.s32.totalorder %s23, 1
    %p256 = por %p254, %p255
    %p258 = scmp.ne.s32.totalorder %s243, %s257
    %p259 = scmp.eq.s32.totalorder %s23, 0
    %p260 = por %p258, %p259
    %s261 = ssub.s32 %s17, %s24
    %p262 = scmp.eq.s32.totalorder %s261, 0
    %s264 = sadd.s32 %s263, 1
    %s265 = scalar_select %p262, %s263, %s264
    %p268 = pneg %p262
    %p269 = scmp.eq.s32.totalorder %s17, 1
    %p270 = por %p268, %p269
    %p271 = scmp.ne.s32.totalorder %s263, %s266
    %p272 = scmp.eq.s32.totalorder %s17, 0
    %p273 = por %p271, %p272
    %p274 = scmp.ne.s32.totalorder %s263, %s266
    %p275 = scmp.eq.s32.totalorder %s22, 1
    %p276 = por %p274, %p275
    %p277 = scmp.ne.s32.totalorder %s266, %s267
    %p278 = scmp.eq.s32.totalorder %s22, 0
    %p279 = por %p277, %p278
    %p280 = scmp.ne.s32.totalorder %s266, %s267
    %p281 = scmp.eq.s32.totalorder %s23, 1
    %p282 = por %p280, %p281
    %p284 = scmp.ne.s32.totalorder %s267, %s283
    %p285 = scmp.eq.s32.totalorder %s23, 0
    %p286 = por %p284, %p285
    %p287 = scmp.le.s32.totalorder 1, %s17
    %p288 = scmp.lt.s32.totalorder %s17, 3
    %p289 = pnand %p287, %p288
    %p290 = pneg %p289
    // Predicated region
    $region9: #{wide_basic_forward.1} parent=5 // pred_check
      _
    $region10: #{wide_basic_forward.1} parent=5 // pred_check_branch
      %292 = sbr.rel (%p289) target = $region12
    $region11: #{wide_basic_forward.1} parent=5 // pred_region
      %s293 = ssub.s32 %s17, 1
      // Predicated region
      $region13: #{wide_basic_forward.1} parent=11 // pred_check
        %p294 = pneg %p64
      $region14: #{wide_basic_forward.1} parent=11 // pred_check_branch
        %296 = sbr.rel (%p294) target = $region16
      $region15: #{wide_basic_forward.1} parent=11 // pred_region
        _
      $region16: #{wide_basic_forward.1} parent=11 // pred_fallthru
        _
      // Predicated region
      $region17: #{wide_basic_forward.1} parent=11 // pred_check
        %p297 = pneg %p85
      $region18: #{wide_basic_forward.1} parent=11 // pred_check_branch
        %299 = sbr.rel (%p297) target = $region20
      $region19: #{wide_basic_forward.1} parent=11 // pred_region
        _
      $region20: #{wide_basic_forward.1} parent=11 // pred_fallthru
        _
      // Predicated region
      $region21: #{wide_basic_forward.1} parent=11 // pred_check
        %p300 = pneg %p106
      $region22: #{wide_basic_forward.1} parent=11 // pred_check_branch
        %302 = sbr.rel (%p300) target = $region24
      $region23: #{wide_basic_forward.1} parent=11 // pred_region
        _
      $region24: #{wide_basic_forward.1} parent=11 // pred_fallthru
        _
      // Predicated region
      $region25: #{wide_basic_forward.1} parent=11 // pred_check
        %p303 = pneg %p127
      $region26: #{wide_basic_forward.1} parent=11 // pred_check_branch
        %305 = sbr.rel (%p303) target = $region28
      $region27: #{wide_basic_forward.1} parent=11 // pred_region
        _
      $region28: #{wide_basic_forward.1} parent=11 // pred_fallthru
        _
      // Predicated region
      $region29: #{wide_basic_forward.1} parent=11 // pred_check
        %p306 = pneg %p148
      $region30: #{wide_basic_forward.1} parent=11 // pred_check_branch
        %308 = sbr.rel (%p306) target = $region32
      $region31: #{wide_basic_forward.1} parent=11 // pred_region
        _
      $region32: #{wide_basic_forward.1} parent=11 // pred_fallthru
        _
      // Predicated region
      $region33: #{wide_basic_forward.1} parent=11 // pred_check
        %p309 = pneg %p169
      $region34: #{wide_basic_forward.1} parent=11 // pred_check_branch
        %311 = sbr.rel (%p309) target = $region36
      $region35: #{wide_basic_forward.1} parent=11 // pred_region
        _
      $region36: #{wide_basic_forward.1} parent=11 // pred_fallthru
        _
      // Predicated region
      $region37: #{wide_basic_forward.1} parent=11 // pred_check
        %p312 = pneg %p190
      $region38: #{wide_basic_forward.1} parent=11 // pred_check_branch
        %314 = sbr.rel (%p312) target = $region40
      $region39: #{wide_basic_forward.1} parent=11 // pred_region
        _
      $region40: #{wide_basic_forward.1} parent=11 // pred_fallthru
        _
      // Predicated region
      $region41: #{wide_basic_forward.1} parent=11 // pred_check
        %p315 = pneg %p211
      $region42: #{wide_basic_forward.1} parent=11 // pred_check_branch
        %317 = sbr.rel (%p315) target = $region44
      $region43: #{wide_basic_forward.1} parent=11 // pred_region
        _
      $region44: #{wide_basic_forward.1} parent=11 // pred_fallthru
        _
      // Predicated region
      $region45: #{wide_basic_forward.1} parent=11 // pred_check
        %p318 = pneg %p232
      $region46: #{wide_basic_forward.1} parent=11 // pred_check_branch
        %320 = sbr.rel (%p318) target = $region48
      $region47: #{wide_basic_forward.1} parent=11 // pred_region
        _
      $region48: #{wide_basic_forward.1} parent=11 // pred_fallthru
        _
      // Predicated region
      $region49: #{wide_basic_forward.1} parent=11 // pred_check
        %p321 = pneg %p253
      $region50: #{wide_basic_forward.1} parent=11 // pred_check_branch
        %323 = sbr.rel (%p321) target = $region52
      $region51: #{wide_basic_forward.1} parent=11 // pred_region
        _
      $region52: #{wide_basic_forward.1} parent=11 // pred_fallthru
        _
    $region12: #{wide_basic_forward.1} parent=5 // pred_fallthru
      _
    %p324 = scmp.lt.s32.totalorder %s17, 2
    // Predicated region
    $region53: #{wide_basic_forward.1} parent=5 // pred_check
      %p325 = pneg %p324
    $region54: #{wide_basic_forward.1} parent=5 // pred_check_branch
      %327 = sbr.rel (%p325) target = $region56
    $region55: #{wide_basic_forward.1} parent=5 // pred_region
      // Predicated region
      $region57: #{wide_basic_forward.1} parent=55 // pred_check
        %p328 = pneg %p37
      $region58: #{wide_basic_forward.1} parent=55 // pred_check_branch
        %330 = sbr.rel (%p328) target = $region60
      $region59: #{wide_basic_forward.1} parent=55 // pred_region
        %p331 = scmp.lt.s32.totalorder %s17, 1
        %s332 = scalar_select %p331, %s17, 1
        %s333 = smul.addr %s332, 2
        %s334 = smul.addr %s333, 8
        %s335 = scalar_lea.vmem %s0, %s334
      $region60: #{wide_basic_forward.1} parent=55 // pred_fallthru
        _
    $region56: #{wide_basic_forward.1} parent=5 // pred_fallthru
      _
    %p336 = scmp.le.s32.totalorder 1, %s17
    %p337 = scmp.lt.s32.totalorder %s17, 3
    %p338 = pnand %p336, %p337
    %p339 = pneg %p338
    // Predicated region
    $region61: #{wide_basic_forward.1} parent=5 // pred_check
      _
    $region62: #{wide_basic_forward.1} parent=5 // pred_check_branch
      %341 = sbr.rel (%p338) target = $region64
    $region63: #{wide_basic_forward.1} parent=5 // pred_region
      %s342 = ssub.s32 %s17, 1
      %p343 = scmp.lt.s32.totalorder %s22, 1
      %s344 = scalar_select %p343, %s22, 1
      %s345 = smul.addr %s344, 2
      %s346 = smul.addr %s345, 8
      %s347 = scalar_lea.vmem %s0, %s346
      %p348 = pneg %p43
      %p349 = pneg %p40
      %p350 = pneg %p64
      %p351 = pneg %p61
      %p352 = pneg %p85
      %p353 = pneg %p82
      %p354 = pneg %p106
      %p355 = pneg %p103
      %p356 = pneg %p127
      %p357 = pneg %p124
      %p358 = pneg %p148
      %p359 = pneg %p145
      %p360 = pneg %p169
      %p361 = pneg %p166
      %p362 = pneg %p190
      %p363 = pneg %p187
      %p364 = pneg %p211
      %p365 = pneg %p208
      %p366 = pneg %p232
      %p367 = pneg %p229
      %p368 = pneg %p253
      %p369 = pneg %p250
      %p370 = pneg %p279
      %p371 = pneg %p276
      %p372 = scmp.lt.s32.totalorder %s22, 1
      %s373 = scalar_select %p372, %s22, 1
      %s374 = smul.addr %s373, 2
      %s375 = smul.addr %s374, 8
      %s376 = scalar_lea.vmem %s11, %s375
      %p377 = scmp.lt.s32.totalorder %s22, 1
      %s378 = scalar_select %p377, %s22, 1
      %s379 = smul.addr %s378, 2
      %s380 = smul.addr %s379, 8
      %s381 = scalar_lea.vmem %s0, %s380
      %p382 = scmp.lt.s32.totalorder %s22, 1
      %s383 = scalar_select %p382, %s22, 1
      %s384 = smul.addr %s383, 2
      %s385 = smul.addr %s384, 8
      %s386 = scalar_lea.vmem %s11, %s385
      %vm387 = vcmask 516096
      %388 = vst.msk [vmem:[#allocation2] sm:$0x1] %vm387, 0.0
      %389 = vst.msk [vmem:[#allocation2 + $0x11] sm:$0x1] %vm387, 0.0
      %390 = vst [vmem:[#allocation3] sm:$0x1] 0.0
      %391 = vst [vmem:[#allocation3 + $0x11] sm:$0x1] 0.0
      %v392 = vld [vmem:[%s381] sm:$0xff]
      %v393 = vld [vmem:[%s381 + $0x8] sm:$0xff]
      %v394 = vld [vmem:[%s1] sm:$0x1]
      %v396 = vlaneseq
      %v397 = vshrl.u32 %v396, 7
      %v398 = vsub.s32 0, %v397
      %v399 = vrot.slane %v394, %v398
      %v401 = vmul.f32 %v392, %v399
      %v402 = vmul.f32 %v393, %v399
      %v403 = vld [vmem:[%s2] sm:$0x1]
      %v405 = vlaneseq
      %v406 = vshrl.u32 %v405, 7
      %v407 = vsub.s32 0, %v406
      %v408 = vrot.slane %v403, %v407
      %v410 = vadd.f32 %v401, %v408
      %v411 = vadd.f32 %v402, %v408
      %v412 = vmax.f32 %v410, 0.0
      %v413 = vmax.f32 %v411, 0.0
      %vm414 = vcmask 523264
      %415 = vst.msk [vmem:[#allocation2 + $0x1] sm:$0xff] %vm414, %v412
      %416 = vst.msk [vmem:[#allocation2 + $0x9] sm:$0xff] %vm414, %v413
      %v417 = vld [vmem:[#allocation2] sm:$0xff]
      %v418 = vld [vmem:[#allocation2 + $0x8] sm:$0xff]
      %v419 = vld [vmem:[%s3] sm:$0xff]
      %v420 = vld [vmem:[%s3 + $0x8] sm:$0xff]
      %v421 = vld [vmem:[%s3 + $0x10] sm:$0xff]
      %v422 = vld [vmem:[%s3 + $0x18] sm:$0xff]
      %v423 = vld [vmem:[%s3 + $0x20] sm:$0xff]
      %v424 = vld [vmem:[%s3 + $0x28] sm:$0xff]
      %v425 = vld [vmem:[%s3 + $0x30] sm:$0xff]
      %v426 = vld [vmem:[%s3 + $0x38] sm:$0xff]
      %v427 = vld [vmem:[#allocation2 + $0x1] sm:$0xff]
      %v428 = vld [vmem:[#allocation2 + $0x9] sm:$0xff]
      %s429 = scalar_lea.vmem %s3, 64
      %v430 = vld [vmem:[%s429] sm:$0xff]
      %v431 = vld [vmem:[%s429 + $0x8] sm:$0xff]
      %v432 = vld [vmem:[%s429 + $0x10] sm:$0xff]
      %v433 = vld [vmem:[%s429 + $0x18] sm:$0xff]
      %v434 = vld [vmem:[%s429 + $0x20] sm:$0xff]
      %v435 = vld [vmem:[%s429 + $0x28] sm:$0xff]
      %v436 = vld [vmem:[%s429 + $0x30] sm:$0xff]
      %v437 = vld [vmem:[%s429 + $0x38] sm:$0xff]
      %v439 = vsel %vm414, %v427, 0
      %v442 = vsel %vm414, %v428, 0
      %444 = vmatprep.subr.mxu0 0.0
      %445 = vmatpush1.msra.mxu0 %v430
      %446 = vmatprep.subr.mxu0 0.0
      %447 = vmatpush1.msra.mxu0 %v431
      %448 = vmatprep.subr.mxu0 0.0
      %449 = vmatpush1.msra.mxu0 %v432
      %450 = vmatprep.subr.mxu0 0.0
      %451 = vmatpush1.msra.mxu0 %v433
      %452 = vmatprep.subr.mxu0 0.0
      %453 = vmatpush1.msra.mxu0 %v434
      %454 = vmatprep.subr.mxu0 0.0
      %455 = vmatpush1.msra.mxu0 %v435
      %456 = vmatprep.subr.mxu0 0.0
      %457 = vmatpush1.msra.mxu0 %v436
      %458 = vmatprep.subr.mxu0 0.0
      %459 = vmatpush1.msra.mxu0 %v437
      %460 = vmatprep.subr.mxu0 0.0
      %461 = vmatpush1.msra.mxu0 0.0
      %462 = vmatprep.subr.mxu0 0.0
      %463 = vmatpush1.msra.mxu0 0.0
      %464 = vmatprep.subr.mxu0 0.0
      %465 = vmatpush1.msra.mxu0 0.0
      %466 = vmatprep.subr.mxu0 0.0
      %467 = vmatpush1.msra.mxu0 0.0
      %468 = vmatprep.subr.mxu0 0.0
      %469 = vmatpush1.msra.mxu0 0.0
      %470 = vmatprep.subr.mxu0 0.0
      %471 = vmatpush1.msra.mxu0 0.0
      %472 = vmatprep.subr.mxu0 0.0
      %473 = vmatpush1.msra.mxu0 0.0
      %474 = vmatprep.subr.mxu0 0.0
      %475 = vmatpush1.msra.mxu0 0.0
      %476 = vmatprep.subr.mxu0 0.0
      %477 = vmatpush1.msra.mxu0 0.0
      %478 = vmatprep.subr.mxu0 0.0
      %479 = vmatpush1.msra.mxu0 0.0
      %480 = vmatprep.subr.mxu0 0.0
      %481 = vmatpush1.msra.mxu0 0.0
      %482 = vmatprep.subr.mxu0 0.0
      %483 = vmatpush1.msra.mxu0 0.0
      %484 = vmatprep.subr.mxu0 0.0
      %485 = vmatpush1.msra.mxu0 0.0
      %486 = vmatprep.subr.mxu0 0.0
      %487 = vmatpush1.msra.mxu0 0.0
      %488 = vmatprep.subr.mxu0 0.0
      %489 = vmatpush1.msra.mxu0 0.0
      %490 = vmatprep.subr.mxu0 0.0
      %491 = vmatpush1.msra.mxu0 0.0
      %492 = vmatprep.subr.mxu0 0.0
      %493 = vmatpush1.msra.mxu0 0.0
      %494 = vmatprep.subr.mxu0 0.0
      %495 = vmatpush1.msra.mxu0 0.0
      %496 = vmatprep.subr.mxu0 0.0
      %497 = vmatpush1.msra.mxu0 0.0
      %498 = vmatprep.subr.mxu0 0.0
      %499 = vmatpush1.msra.mxu0 0.0
      %500 = vmatprep.subr.mxu0 0.0
      %501 = vmatpush1.msra.mxu0 0.0
      %502 = vmatprep.subr.mxu0 0.0
      %503 = vmatpush1.msra.mxu0 0.0
      %504 = vmatprep.subr.mxu0 0.0
      %505 = vmatpush1.msra.mxu0 0.0
      %506 = vmatprep.subr.mxu0 0.0
      %507 = vmatpush1.msra.mxu0 0.0
      %508 = vmatprep.mubr.f32.mxu0 0.0
      %509 = vmatmul.mubr.f32.gmra.mrb[0].mxu0 %v439
      %v510 = vpop.f32.mrb[0].mxu0
      %v511 = vadd.f32 0.0, %v510
      %v512 = vpop.f32.mrb[0].mxu0
      %513 = vmatprep.mubr.f32.mxu0 0.0
      %514 = vmatmul.mubr.f32.gmra.mrb[0].mxu0 %v442
      %v515 = vpop.f32.mrb[0].mxu0
      %v516 = vadd.f32 0.0, %v515
      %v517 = vpop.f32.mrb[0].mxu0
      %518 = vdwg.mxu0
      %v520 = vsel %vm414, %v417, 0
      %v523 = vsel %vm414, %v418, 0
      %525 = vmatprep.subr.mxu0 0.0
      %526 = vmatpush1.msra.mxu0 %v419
      %527 = vmatprep.subr.mxu0 0.0
      %528 = vmatpush1.msra.mxu0 %v420
      %529 = vmatprep.subr.mxu0 0.0
      %530 = vmatpush1.msra.mxu0 %v421
      %531 = vmatprep.subr.mxu0 0.0
      %532 = vmatpush1.msra.mxu0 %v422
      %533 = vmatprep.subr.mxu0 0.0
      %534 = vmatpush1.msra.mxu0 %v423
      %535 = vmatprep.subr.mxu0 0.0
      %536 = vmatpush1.msra.mxu0 %v424
      %537 = vmatprep.subr.mxu0 0.0
      %538 = vmatpush1.msra.mxu0 %v425
      %539 = vmatprep.subr.mxu0 0.0
      %540 = vmatpush1.msra.mxu0 %v426
      %541 = vmatprep.subr.mxu0 0.0
      %542 = vmatpush1.msra.mxu0 0.0
      %543 = vmatprep.subr.mxu0 0.0
      %544 = vmatpush1.msra.mxu0 0.0
      %545 = vmatprep.subr.mxu0 0.0
      %546 = vmatpush1.msra.mxu0 0.0
      %547 = vmatprep.subr.mxu0 0.0
      %548 = vmatpush1.msra.mxu0 0.0
      %549 = vmatprep.subr.mxu0 0.0
      %550 = vmatpush1.msra.mxu0 0.0
      %551 = vmatprep.subr.mxu0 0.0
      %552 = vmatpush1.msra.mxu0 0.0
      %553 = vmatprep.subr.mxu0 0.0
      %554 = vmatpush1.msra.mxu0 0.0
      %555 = vmatprep.subr.mxu0 0.0
      %556 = vmatpush1.msra.mxu0 0.0
      %557 = vmatprep.subr.mxu0 0.0
      %558 = vmatpush1.msra.mxu0 0.0
      %559 = vmatprep.subr.mxu0 0.0
      %560 = vmatpush1.msra.mxu0 0.0
      %561 = vmatprep.subr.mxu0 0.0
      %562 = vmatpush1.msra.mxu0 0.0
      %563 = vmatprep.subr.mxu0 0.0
      %564 = vmatpush1.msra.mxu0 0.0
      %565 = vmatprep.subr.mxu0 0.0
      %566 = vmatpush1.msra.mxu0 0.0
      %567 = vmatprep.subr.mxu0 0.0
      %568 = vmatpush1.msra.mxu0 0.0
      %569 = vmatprep.subr.mxu0 0.0
      %570 = vmatpush1.msra.mxu0 0.0
      %571 = vmatprep.subr.mxu0 0.0
      %572 = vmatpush1.msra.mxu0 0.0
      %573 = vmatprep.subr.mxu0 0.0
      %574 = vmatpush1.msra.mxu0 0.0
      %575 = vmatprep.subr.mxu0 0.0
      %576 = vmatpush1.msra.mxu0 0.0
      %577 = vmatprep.subr.mxu0 0.0
      %578 = vmatpush1.msra.mxu0 0.0
      %579 = vmatprep.subr.mxu0 0.0
      %580 = vmatpush1.msra.mxu0 0.0
      %581 = vmatprep.subr.mxu0 0.0
      %582 = vmatpush1.msra.mxu0 0.0
      %583 = vmatprep.subr.mxu0 0.0
      %584 = vmatpush1.msra.mxu0 0.0
      %585 = vmatprep.subr.mxu0 0.0
      %586 = vmatpush1.msra.mxu0 0.0
      %587 = vmatprep.subr.mxu0 0.0
      %588 = vmatpush1.msra.mxu0 0.0
      %589 = vmatprep.mubr.f32.mxu0 0.0
      %590 = vmatmul.mubr.f32.gmra.mrb[0].mxu0 %v520
      %v591 = vpop.f32.mrb[0].mxu0
      %v592 = vadd.f32 %v511, %v591
      %v593 = vpop.f32.mrb[0].mxu0
      %594 = vmatprep.mubr.f32.mxu0 0.0
      %595 = vmatmul.mubr.f32.gmra.mrb[0].mxu0 %v523
      %v596 = vpop.f32.mrb[0].mxu0
      %v597 = vadd.f32 %v516, %v596
      %v598 = vpop.f32.mrb[0].mxu0
      %599 = vdwg.mxu0
      %v600 = vld [vmem:[#allocation2 + $0x2] sm:$0xff]
      %v601 = vld [vmem:[#allocation2 + $0xa] sm:$0xff]
      %s602 = scalar_lea.vmem %s3, 128
      %v603 = vld [vmem:[%s602] sm:$0xff]
      %v604 = vld [vmem:[%s602 + $0x8] sm:$0xff]
      %v605 = vld [vmem:[%s602 + $0x10] sm:$0xff]
      %v606 = vld [vmem:[%s602 + $0x18] sm:$0xff]
      %v607 = vld [vmem:[%s602 + $0x20] sm:$0xff]
      %v608 = vld [vmem:[%s602 + $0x28] sm:$0xff]
      %v609 = vld [vmem:[%s602 + $0x30] sm:$0xff]
      %v610 = vld [vmem:[%s602 + $0x38] sm:$0xff]
      %v612 = vsel %vm414, %v600, 0
      %v615 = vsel %vm414, %v601, 0
      %617 = vmatprep.subr.mxu0 0.0
      %618 = vmatpush1.msra.mxu0 %v603
      %619 = vmatprep.subr.mxu0 0.0
      %620 = vmatpush1.msra.mxu0 %v604
      %621 = vmatprep.subr.mxu0 0.0
      %622 = vmatpush1.msra.mxu0 %v605
      %623 = vmatprep.subr.mxu0 0.0
      %624 = vmatpush1.msra.mxu0 %v606
      %625 = vmatprep.subr.mxu0 0.0
      %626 = vmatpush1.msra.mxu0 %v607
      %627 = vmatprep.subr.mxu0 0.0
      %628 = vmatpush1.msra.mxu0 %v608
      %629 = vmatprep.subr.mxu0 0.0
      %630 = vmatpush1.msra.mxu0 %v609
      %631 = vmatprep.subr.mxu0 0.0
      %632 = vmatpush1.msra.mxu0 %v610
      %633 = vmatprep.subr.mxu0 0.0
      %634 = vmatpush1.msra.mxu0 0.0
      %635 = vmatprep.subr.mxu0 0.0
      %636 = vmatpush1.msra.mxu0 0.0
      %637 = vmatprep.subr.mxu0 0.0
      %638 = vmatpush1.msra.mxu0 0.0
      %639 = vmatprep.subr.mxu0 0.0
      %640 = vmatpush1.msra.mxu0 0.0
      %641 = vmatprep.subr.mxu0 0.0
      %642 = vmatpush1.msra.mxu0 0.0
      %643 = vmatprep.subr.mxu0 0.0
      %644 = vmatpush1.msra.mxu0 0.0
      %645 = vmatprep.subr.mxu0 0.0
      %646 = vmatpush1.msra.mxu0 0.0
      %647 = vmatprep.subr.mxu0 0.0
      %648 = vmatpush1.msra.mxu0 0.0
      %649 = vmatprep.subr.mxu0 0.0
      %650 = vmatpush1.msra.mxu0 0.0
      %651 = vmatprep.subr.mxu0 0.0
      %652 = vmatpush1.msra.mxu0 0.0
      %653 = vmatprep.subr.mxu0 0.0
      %654 = vmatpush1.msra.mxu0 0.0
      %655 = vmatprep.subr.mxu0 0.0
      %656 = vmatpush1.msra.mxu0 0.0
      %657 = vmatprep.subr.mxu0 0.0
      %658 = vmatpush1.msra.mxu0 0.0
      %659 = vmatprep.subr.mxu0 0.0
      %660 = vmatpush1.msra.mxu0 0.0
      %661 = vmatprep.subr.mxu0 0.0
      %662 = vmatpush1.msra.mxu0 0.0
      %663 = vmatprep.subr.mxu0 0.0
      %664 = vmatpush1.msra.mxu0 0.0
      %665 = vmatprep.subr.mxu0 0.0
      %666 = vmatpush1.msra.mxu0 0.0
      %667 = vmatprep.subr.mxu0 0.0
      %668 = vmatpush1.msra.mxu0 0.0
      %669 = vmatprep.subr.mxu0 0.0
      %670 = vmatpush1.msra.mxu0 0.0
      %671 = vmatprep.subr.mxu0 0.0
      %672 = vmatpush1.msra.mxu0 0.0
      %673 = vmatprep.subr.mxu0 0.0
      %674 = vmatpush1.msra.mxu0 0.0
      %675 = vmatprep.subr.mxu0 0.0
      %676 = vmatpush1.msra.mxu0 0.0
      %677 = vmatprep.subr.mxu0 0.0
      %678 = vmatpush1.msra.mxu0 0.0
      %679 = vmatprep.subr.mxu0 0.0
      %680 = vmatpush1.msra.mxu0 0.0
      %681 = vmatprep.mubr.f32.mxu0 0.0
      %682 = vmatmul.mubr.f32.gmra.mrb[0].mxu0 %v612
      %v683 = vpop.f32.mrb[0].mxu0
      %v684 = vadd.f32 0.0, %v683
      %v685 = vpop.f32.mrb[0].mxu0
      %686 = vmatprep.mubr.f32.mxu0 0.0
      %687 = vmatmul.mubr.f32.gmra.mrb[0].mxu0 %v615
      %v688 = vpop.f32.mrb[0].mxu0
      %v689 = vadd.f32 0.0, %v688
      %v690 = vpop.f32.mrb[0].mxu0
      %691 = vdwg.mxu0
      %v692 = vadd.f32 %v592, %v684
      %v693 = vadd.f32 %v597, %v689
      %v694 = vld [vmem:[%s4] sm:$0x1]
      %v696 = vlaneseq
      %v697 = vshrl.u32 %v696, 7
      %v698 = vsub.s32 0, %v697
      %v699 = vrot.slane %v694, %v698
      %v701 = vadd.f32 %v692, %v699
      %v702 = vadd.f32 %v693, %v699
      %v703 = vld [vmem:[%s5] sm:$0x1]
      %v705 = vlaneseq
      %v706 = vshrl.u32 %v705, 7
      %v707 = vsub.s32 0, %v706
      %v708 = vrot.slane %v703, %v707
      %v710 = vmul.f32 %v701, %v708
      %v711 = vmul.f32 %v702, %v708
      %v712 = vld [vmem:[%s6] sm:$0x1]
      %v714 = vlaneseq
      %v715 = vshrl.u32 %v714, 7
      %v716 = vsub.s32 0, %v715
      %v717 = vrot.slane %v712, %v716
      %v719 = vadd.f32 %v710, %v717
      %v720 = vadd.f32 %v711, %v717
      %v721 = vmax.f32 %v719, 0.0
      %v722 = vmax.f32 %v720, 0.0
      %723 = vst [vmem:[#allocation3 + $0x1] sm:$0xff] %v721
      %724 = vst [vmem:[#allocation3 + $0x9] sm:$0xff] %v722
      %v725 = vld [vmem:[#allocation3] sm:$0xff]
      %v726 = vld [vmem:[#allocation3 + $0x8] sm:$0xff]
      %v727 = vld [vmem:[%s7] sm:$0xff]
      %v728 = vld [vmem:[%s7 + $0x8] sm:$0xff]
      %v729 = vld [vmem:[%s7 + $0x10] sm:$0xff]
      %v730 = vld [vmem:[%s7 + $0x18] sm:$0xff]
      %v731 = vld [vmem:[%s7 + $0x20] sm:$0xff]
      %v732 = vld [vmem:[%s7 + $0x28] sm:$0xff]
      %v733 = vld [vmem:[%s7 + $0x30] sm:$0xff]
      %v734 = vld [vmem:[%s7 + $0x38] sm:$0xff]
      %v735 = vld [vmem:[%s7 + $0x40] sm:$0xff]
      %v736 = vld [vmem:[%s7 + $0x48] sm:$0xff]
      %v737 = vld [vmem:[%s7 + $0x50] sm:$0xff]
      %v738 = vld [vmem:[%s7 + $0x58] sm:$0xff]
      %v739 = vld [vmem:[%s7 + $0x60] sm:$0xff]
      %v740 = vld [vmem:[%s7 + $0x68] sm:$0xff]
      %v741 = vld [vmem:[%s7 + $0x70] sm:$0xff]
      %v742 = vld [vmem:[%s7 + $0x78] sm:$0xff]
      %v743 = vld [vmem:[#allocation3 + $0x1] sm:$0xff]
      %v744 = vld [vmem:[#allocation3 + $0x9] sm:$0xff]
      %s745 = scalar_lea.vmem %s7, 128
      %v746 = vld [vmem:[%s745] sm:$0xff]
      %v747 = vld [vmem:[%s745 + $0x8] sm:$0xff]
      %v748 = vld [vmem:[%s745 + $0x10] sm:$0xff]
      %v749 = vld [vmem:[%s745 + $0x18] sm:$0xff]
      %v750 = vld [vmem:[%s745 + $0x20] sm:$0xff]
      %v751 = vld [vmem:[%s745 + $0x28] sm:$0xff]
      %v752 = vld [vmem:[%s745 + $0x30] sm:$0xff]
      %v753 = vld [vmem:[%s745 + $0x38] sm:$0xff]
      %v754 = vld [vmem:[%s745 + $0x40] sm:$0xff]
      %v755 = vld [vmem:[%s745 + $0x48] sm:$0xff]
      %v756 = vld [vmem:[%s745 + $0x50] sm:$0xff]
      %v757 = vld [vmem:[%s745 + $0x58] sm:$0xff]
      %v758 = vld [vmem:[%s745 + $0x60] sm:$0xff]
      %v759 = vld [vmem:[%s745 + $0x68] sm:$0xff]
      %v760 = vld [vmem:[%s745 + $0x70] sm:$0xff]
      %v761 = vld [vmem:[%s745 + $0x78] sm:$0xff]
      %762 = vmatprep.subr.mxu0 0.0
      %763 = vmatpush1.msra.mxu0 %v746
      %764 = vmatprep.subr.mxu0 0.0
      %765 = vmatpush1.msra.mxu0 %v747
      %766 = vmatprep.subr.mxu0 0.0
      %767 = vmatpush1.msra.mxu0 %v748
      %768 = vmatprep.subr.mxu0 0.0
      %769 = vmatpush1.msra.mxu0 %v749
      %770 = vmatprep.subr.mxu0 0.0
      %771 = vmatpush1.msra.mxu0 %v750
      %772 = vmatprep.subr.mxu0 0.0
      %773 = vmatpush1.msra.mxu0 %v751
      %774 = vmatprep.subr.mxu0 0.0
      %775 = vmatpush1.msra.mxu0 %v752
      %776 = vmatprep.subr.mxu0 0.0
      %777 = vmatpush1.msra.mxu0 %v753
      %778 = vmatprep.subr.mxu0 0.0
      %779 = vmatpush1.msra.mxu0 %v754
      %780 = vmatprep.subr.mxu0 0.0
      %781 = vmatpush1.msra.mxu0 %v755
      %782 = vmatprep.subr.mxu0 0.0
      %783 = vmatpush1.msra.mxu0 %v756
      %784 = vmatprep.subr.mxu0 0.0
      %785 = vmatpush1.msra.mxu0 %v757
      %786 = vmatprep.subr.mxu0 0.0
      %787 = vmatpush1.msra.mxu0 %v758
      %788 = vmatprep.subr.mxu0 0.0
      %789 = vmatpush1.msra.mxu0 %v759
      %790 = vmatprep.subr.mxu0 0.0
      %791 = vmatpush1.msra.mxu0 %v760
      %792 = vmatprep.subr.mxu0 0.0
      %793 = vmatpush1.msra.mxu0 %v761
      %794 = vmatprep.subr.mxu0 0.0
      %795 = vmatpush1.msra.mxu0 0.0
      %796 = vmatprep.subr.mxu0 0.0
      %797 = vmatpush1.msra.mxu0 0.0
      %798 = vmatprep.subr.mxu0 0.0
      %799 = vmatpush1.msra.mxu0 0.0
      %800 = vmatprep.subr.mxu0 0.0
      %801 = vmatpush1.msra.mxu0 0.0
      %802 = vmatprep.subr.mxu0 0.0
      %803 = vmatpush1.msra.mxu0 0.0
      %804 = vmatprep.subr.mxu0 0.0
      %805 = vmatpush1.msra.mxu0 0.0
      %806 = vmatprep.subr.mxu0 0.0
      %807 = vmatpush1.msra.mxu0 0.0
      %808 = vmatprep.subr.mxu0 0.0
      %809 = vmatpush1.msra.mxu0 0.0
      %810 = vmatprep.subr.mxu0 0.0
      %811 = vmatpush1.msra.mxu0 0.0
      %812 = vmatprep.subr.mxu0 0.0
      %813 = vmatpush1.msra.mxu0 0.0
      %814 = vmatprep.subr.mxu0 0.0
      %815 = vmatpush1.msra.mxu0 0.0
      %816 = vmatprep.subr.mxu0 0.0
      %817 = vmatpush1.msra.mxu0 0.0
      %818 = vmatprep.subr.mxu0 0.0
      %819 = vmatpush1.msra.mxu0 0.0
      %820 = vmatprep.subr.mxu0 0.0
      %821 = vmatpush1.msra.mxu0 0.0
      %822 = vmatprep.subr.mxu0 0.0
      %823 = vmatpush1.msra.mxu0 0.0
      %824 = vmatprep.subr.mxu0 0.0
      %825 = vmatpush1.msra.mxu0 0.0
      %826 = vmatprep.mubr.f32.mxu0 0.0
      %827 = vmatmul.mubr.f32.gmra.mrb[0].mxu0 %v743
      %v828 = vpop.f32.mrb[0].mxu0
      %v829 = vadd.f32 0.0, %v828
      %v830 = vpop.f32.mrb[0].mxu0
      %831 = vmatprep.mubr.f32.mxu0 0.0
      %832 = vmatmul.mubr.f32.gmra.mrb[0].mxu0 %v744
      %v833 = vpop.f32.mrb[0].mxu0
      %v834 = vadd.f32 0.0, %v833
      %v835 = vpop.f32.mrb[0].mxu0
      %836 = vdwg.mxu0
      %837 = vmatprep.subr.mxu0 0.0
      %838 = vmatpush1.msra.mxu0 %v727
      %839 = vmatprep.subr.mxu0 0.0
      %840 = vmatpush1.msra.mxu0 %v728
      %841 = vmatprep.subr.mxu0 0.0
      %842 = vmatpush1.msra.mxu0 %v729
      %843 = vmatprep.subr.mxu0 0.0
      %844 = vmatpush1.msra.mxu0 %v730
      %845 = vmatprep.subr.mxu0 0.0
      %846 = vmatpush1.msra.mxu0 %v731
      %847 = vmatprep.subr.mxu0 0.0
      %848 = vmatpush1.msra.mxu0 %v732
      %849 = vmatprep.subr.mxu0 0.0
      %850 = vmatpush1.msra.mxu0 %v733
      %851 = vmatprep.subr.mxu0 0.0
      %852 = vmatpush1.msra.mxu0 %v734
      %853 = vmatprep.subr.mxu0 0.0
      %854 = vmatpush1.msra.mxu0 %v735
      %855 = vmatprep.subr.mxu0 0.0
      %856 = vmatpush1.msra.mxu0 %v736
      %857 = vmatprep.subr.mxu0 0.0
      %858 = vmatpush1.msra.mxu0 %v737
      %859 = vmatprep.subr.mxu0 0.0
      %860 = vmatpush1.msra.mxu0 %v738
      %861 = vmatprep.subr.mxu0 0.0
      %862 = vmatpush1.msra.mxu0 %v739
      %863 = vmatprep.subr.mxu0 0.0
      %864 = vmatpush1.msra.mxu0 %v740
      %865 = vmatprep.subr.mxu0 0.0
      %866 = vmatpush1.msra.mxu0 %v741
      %867 = vmatprep.subr.mxu0 0.0
      %868 = vmatpush1.msra.mxu0 %v742
      %869 = vmatprep.subr.mxu0 0.0
      %870 = vmatpush1.msra.mxu0 0.0
      %871 = vmatprep.subr.mxu0 0.0
      %872 = vmatpush1.msra.mxu0 0.0
      %873 = vmatprep.subr.mxu0 0.0
      %874 = vmatpush1.msra.mxu0 0.0
      %875 = vmatprep.subr.mxu0 0.0
      %876 = vmatpush1.msra.mxu0 0.0
      %877 = vmatprep.subr.mxu0 0.0
      %878 = vmatpush1.msra.mxu0 0.0
      %879 = vmatprep.subr.mxu0 0.0
      %880 = vmatpush1.msra.mxu0 0.0
      %881 = vmatprep.subr.mxu0 0.0
      %882 = vmatpush1.msra.mxu0 0.0
      %883 = vmatprep.subr.mxu0 0.0
      %884 = vmatpush1.msra.mxu0 0.0
      %885 = vmatprep.subr.mxu0 0.0
      %886 = vmatpush1.msra.mxu0 0.0
      %887 = vmatprep.subr.mxu0 0.0
      %888 = vmatpush1.msra.mxu0 0.0
      %889 = vmatprep.subr.mxu0 0.0
      %890 = vmatpush1.msra.mxu0 0.0
      %891 = vmatprep.subr.mxu0 0.0
      %892 = vmatpush1.msra.mxu0 0.0
      %893 = vmatprep.subr.mxu0 0.0
      %894 = vmatpush1.msra.mxu0 0.0
      %895 = vmatprep.subr.mxu0 0.0
      %896 = vmatpush1.msra.mxu0 0.0
      %897 = vmatprep.subr.mxu0 0.0
      %898 = vmatpush1.msra.mxu0 0.0
      %899 = vmatprep.subr.mxu0 0.0
      %900 = vmatpush1.msra.mxu0 0.0
      %901 = vmatprep.mubr.f32.mxu0 0.0
      %902 = vmatmul.mubr.f32.gmra.mrb[0].mxu0 %v725
      %v903 = vpop.f32.mrb[0].mxu0
      %v904 = vadd.f32 %v829, %v903
      %v905 = vpop.f32.mrb[0].mxu0
      %906 = vmatprep.mubr.f32.mxu0 0.0
      %907 = vmatmul.mubr.f32.gmra.mrb[0].mxu0 %v726
      %v908 = vpop.f32.mrb[0].mxu0
      %v909 = vadd.f32 %v834, %v908
      %v910 = vpop.f32.mrb[0].mxu0
      %911 = vdwg.mxu0
      %v912 = vld [vmem:[#allocation3 + $0x2] sm:$0xff]
      %v913 = vld [vmem:[#allocation3 + $0xa] sm:$0xff]
      %s914 = scalar_lea.vmem %s7, 256
      %v915 = vld [vmem:[%s914] sm:$0xff]
      %v916 = vld [vmem:[%s914 + $0x8] sm:$0xff]
      %v917 = vld [vmem:[%s914 + $0x10] sm:$0xff]
      %v918 = vld [vmem:[%s914 + $0x18] sm:$0xff]
      %v919 = vld [vmem:[%s914 + $0x20] sm:$0xff]
      %v920 = vld [vmem:[%s914 + $0x28] sm:$0xff]
      %v921 = vld [vmem:[%s914 + $0x30] sm:$0xff]
      %v922 = vld [vmem:[%s914 + $0x38] sm:$0xff]
      %v923 = vld [vmem:[%s914 + $0x40] sm:$0xff]
      %v924 = vld [vmem:[%s914 + $0x48] sm:$0xff]
      %v925 = vld [vmem:[%s914 + $0x50] sm:$0xff]
      %v926 = vld [vmem:[%s914 + $0x58] sm:$0xff]
      %v927 = vld [vmem:[%s914 + $0x60] sm:$0xff]
      %v928 = vld [vmem:[%s914 + $0x68] sm:$0xff]
      %v929 = vld [vmem:[%s914 + $0x70] sm:$0xff]
      %v930 = vld [vmem:[%s914 + $0x78] sm:$0xff]
      %931 = vmatprep.subr.mxu0 0.0
      %932 = vmatpush1.msra.mxu0 %v915
      %933 = vmatprep.subr.mxu0 0.0
      %934 = vmatpush1.msra.mxu0 %v916
      %935 = vmatprep.subr.mxu0 0.0
      %936 = vmatpush1.msra.mxu0 %v917
      %937 = vmatprep.subr.mxu0 0.0
      %938 = vmatpush1.msra.mxu0 %v918
      %939 = vmatprep.subr.mxu0 0.0
      %940 = vmatpush1.msra.mxu0 %v919
      %941 = vmatprep.subr.mxu0 0.0
      %942 = vmatpush1.msra.mxu0 %v920
      %943 = vmatprep.subr.mxu0 0.0
      %944 = vmatpush1.msra.mxu0 %v921
      %945 = vmatprep.subr.mxu0 0.0
      %946 = vmatpush1.msra.mxu0 %v922
      %947 = vmatprep.subr.mxu0 0.0
      %948 = vmatpush1.msra.mxu0 %v923
      %949 = vmatprep.subr.mxu0 0.0
      %950 = vmatpush1.msra.mxu0 %v924
      %951 = vmatprep.subr.mxu0 0.0
      %952 = vmatpush1.msra.mxu0 %v925
      %953 = vmatprep.subr.mxu0 0.0
      %954 = vmatpush1.msra.mxu0 %v926
      %955 = vmatprep.subr.mxu0 0.0
      %956 = vmatpush1.msra.mxu0 %v927
      %957 = vmatprep.subr.mxu0 0.0
      %958 = vmatpush1.msra.mxu0 %v928
      %959 = vmatprep.subr.mxu0 0.0
      %960 = vmatpush1.msra.mxu0 %v929
      %961 = vmatprep.subr.mxu0 0.0
      %962 = vmatpush1.msra.mxu0 %v930
      %963 = vmatprep.subr.mxu0 0.0
      %964 = vmatpush1.msra.mxu0 0.0
      %965 = vmatprep.subr.mxu0 0.0
      %966 = vmatpush1.msra.mxu0 0.0
      %967 = vmatprep.subr.mxu0 0.0
      %968 = vmatpush1.msra.mxu0 0.0
      %969 = vmatprep.subr.mxu0 0.0
      %970 = vmatpush1.msra.mxu0 0.0
      %971 = vmatprep.subr.mxu0 0.0
      %972 = vmatpush1.msra.mxu0 0.0
      %973 = vmatprep.subr.mxu0 0.0
      %974 = vmatpush1.msra.mxu0 0.0
      %975 = vmatprep.subr.mxu0 0.0
      %976 = vmatpush1.msra.mxu0 0.0
      %977 = vmatprep.subr.mxu0 0.0
      %978 = vmatpush1.msra.mxu0 0.0
      %979 = vmatprep.subr.mxu0 0.0
      %980 = vmatpush1.msra.mxu0 0.0
      %981 = vmatprep.subr.mxu0 0.0
      %982 = vmatpush1.msra.mxu0 0.0
      %983 = vmatprep.subr.mxu0 0.0
      %984 = vmatpush1.msra.mxu0 0.0
      %985 = vmatprep.subr.mxu0 0.0
      %986 = vmatpush1.msra.mxu0 0.0
      %987 = vmatprep.subr.mxu0 0.0
      %988 = vmatpush1.msra.mxu0 0.0
      %989 = vmatprep.subr.mxu0 0.0
      %990 = vmatpush1.msra.mxu0 0.0
      %991 = vmatprep.subr.mxu0 0.0
      %992 = vmatpush1.msra.mxu0 0.0
      %993 = vmatprep.subr.mxu0 0.0
      %994 = vmatpush1.msra.mxu0 0.0
      %995 = vmatprep.mubr.f32.mxu0 0.0
      %996 = vmatmul.mubr.f32.gmra.mrb[0].mxu0 %v912
      %v997 = vpop.f32.mrb[0].mxu0
      %v998 = vadd.f32 0.0, %v997
      %v999 = vpop.f32.mrb[0].mxu0
      %1000 = vmatprep.mubr.f32.mxu0 0.0
      %1001 = vmatmul.mubr.f32.gmra.mrb[0].mxu0 %v913
      %v1002 = vpop.f32.mrb[0].mxu0
      %v1003 = vadd.f32 0.0, %v1002
      %v1004 = vpop.f32.mrb[0].mxu0
      %1005 = vdwg.mxu0
      %v1006 = vadd.f32 %v904, %v998
      %v1007 = vadd.f32 %v909, %v1003
      %v1008 = vld [vmem:[%s8] sm:$0x1]
      %v1010 = vlaneseq
      %v1011 = vshrl.u32 %v1010, 7
      %v1012 = vsub.s32 0, %v1011
      %v1013 = vrot.slane %v1008, %v1012
      %v1015 = vadd.f32 %v1006, %v1013
      %v1016 = vadd.f32 %v1007, %v1013
      %v1017 = vld [vmem:[%s9] sm:$0xff]
      %v1018 = vld [vmem:[%s9 + $0x8] sm:$0xff]
      %v1019 = vld [vmem:[%s9 + $0x10] sm:$0xff]
      %v1020 = vld [vmem:[%s9 + $0x18] sm:$0xff]
      %v1021 = vld [vmem:[%s9 + $0x20] sm:$0xff]
      %v1022 = vld [vmem:[%s9 + $0x28] sm:$0xff]
      %v1023 = vld [vmem:[%s9 + $0x30] sm:$0xff]
      %v1024 = vld [vmem:[%s9 + $0x38] sm:$0xff]
      %v1025 = vld [vmem:[%s10] sm:$0x1]
      %v1027 = vlaneseq
      %v1028 = vshrl.u32 %v1027, 7
      %v1029 = vsub.s32 0, %v1028
      %v1030 = vrot.slane %v1025, %v1029
      %v1033 = vsel %vm414, %v392, 0
      %v1036 = vsel %vm414, %v393, 0
      %1038 = vmatprep.subr.mxu0 0.0
      %1039 = vmatpush1.msra.mxu0 %v1017
      %1040 = vmatprep.subr.mxu0 0.0
      %1041 = vmatpush1.msra.mxu0 %v1018
      %1042 = vmatprep.subr.mxu0 0.0
      %1043 = vmatpush1.msra.mxu0 %v1019
      %1044 = vmatprep.subr.mxu0 0.0
      %1045 = vmatpush1.msra.mxu0 %v1020
      %1046 = vmatprep.subr.mxu0 0.0
      %1047 = vmatpush1.msra.mxu0 %v1021
      %1048 = vmatprep.subr.mxu0 0.0
      %1049 = vmatpush1.msra.mxu0 %v1022
      %1050 = vmatprep.subr.mxu0 0.0
      %1051 = vmatpush1.msra.mxu0 %v1023
      %1052 = vmatprep.subr.mxu0 0.0
      %1053 = vmatpush1.msra.mxu0 %v1024
      %1054 = vmatprep.subr.mxu0 0.0
      %1055 = vmatpush1.msra.mxu0 0.0
      %1056 = vmatprep.subr.mxu0 0.0
      %1057 = vmatpush1.msra.mxu0 0.0
      %1058 = vmatprep.subr.mxu0 0.0
      %1059 = vmatpush1.msra.mxu0 0.0
      %1060 = vmatprep.subr.mxu0 0.0
      %1061 = vmatpush1.msra.mxu0 0.0
      %1062 = vmatprep.subr.mxu0 0.0
      %1063 = vmatpush1.msra.mxu0 0.0
      %1064 = vmatprep.subr.mxu0 0.0
      %1065 = vmatpush1.msra.mxu0 0.0
      %1066 = vmatprep.subr.mxu0 0.0
      %1067 = vmatpush1.msra.mxu0 0.0
      %1068 = vmatprep.subr.mxu0 0.0
      %1069 = vmatpush1.msra.mxu0 0.0
      %1070 = vmatprep.subr.mxu0 0.0
      %1071 = vmatpush1.msra.mxu0 0.0
      %1072 = vmatprep.subr.mxu0 0.0
      %1073 = vmatpush1.msra.mxu0 0.0
      %1074 = vmatprep.subr.mxu0 0.0
      %1075 = vmatpush1.msra.mxu0 0.0
      %1076 = vmatprep.subr.mxu0 0.0
      %1077 = vmatpush1.msra.mxu0 0.0
      %1078 = vmatprep.subr.mxu0 0.0
      %1079 = vmatpush1.msra.mxu0 0.0
      %1080 = vmatprep.subr.mxu0 0.0
      %1081 = vmatpush1.msra.mxu0 0.0
      %1082 = vmatprep.subr.mxu0 0.0
      %1083 = vmatpush1.msra.mxu0 0.0
      %1084 = vmatprep.subr.mxu0 0.0
      %1085 = vmatpush1.msra.mxu0 0.0
      %1086 = vmatprep.subr.mxu0 0.0
      %1087 = vmatpush1.msra.mxu0 0.0
      %1088 = vmatprep.subr.mxu0 0.0
      %1089 = vmatpush1.msra.mxu0 0.0
      %1090 = vmatprep.subr.mxu0 0.0
      %1091 = vmatpush1.msra.mxu0 0.0
      %1092 = vmatprep.subr.mxu0 0.0
      %1093 = vmatpush1.msra.mxu0 0.0
      %1094 = vmatprep.subr.mxu0 0.0
      %1095 = vmatpush1.msra.mxu0 0.0
      %1096 = vmatprep.subr.mxu0 0.0
      %1097 = vmatpush1.msra.mxu0 0.0
      %1098 = vmatprep.subr.mxu0 0.0
      %1099 = vmatpush1.msra.mxu0 0.0
      %1100 = vmatprep.subr.mxu0 0.0
      %1101 = vmatpush1.msra.mxu0 0.0
      %1102 = vmatprep.mubr.f32.mxu0 0.0
      %1103 = vmatmul.mubr.f32.gmra.mrb[0].mxu0 %v1033
      %v1104 = vpop.f32.mrb[0].mxu0
      %v1105 = vadd.f32 %v1030, %v1104
      %v1106 = vpop.f32.mrb[0].mxu0
      %1107 = vmatprep.mubr.f32.mxu0 0.0
      %1108 = vmatmul.mubr.f32.gmra.mrb[0].mxu0 %v1036
      %v1109 = vpop.f32.mrb[0].mxu0
      %v1110 = vadd.f32 %v1030, %v1109
      %v1111 = vpop.f32.mrb[0].mxu0
      %1112 = vdwg.mxu0
      %v1113 = vadd.f32 %v1015, %v1105
      %v1114 = vadd.f32 %v1016, %v1110
      %1115 = vst [vmem:[%s386] sm:$0xff] %v1113
      %1116 = vst [vmem:[%s386 + $0x8] sm:$0xff] %v1114
      %p1117 = scmp.lt.s32.totalorder %s22, 1
      %s1118 = scalar_select %p1117, %s22, 1
      %s1119 = smul.addr %s1118, 2
      %s1120 = smul.addr %s1119, 8
      %s1121 = scalar_lea.vmem %s11, %s1120
      // Predicated region
      $region65: #{wide_basic_forward.1} parent=63 // pred_check
        %p1122 = pneg %p276
      $region66: #{wide_basic_forward.1} parent=63 // pred_check_branch
        %1124 = sbr.rel (%p1122) target = $region68
      $region67: #{wide_basic_forward.1} parent=63 // pred_region
        _
      $region68: #{wide_basic_forward.1} parent=63 // pred_fallthru
        _
    $region64: #{wide_basic_forward.1} parent=5 // pred_fallthru
      _
    %p1125 = scmp.le.s32.totalorder 2, %s17
    // Predicated region
    $region69: #{wide_basic_forward.1} parent=5 // pred_check
      %p1126 = pneg %p1125
    $region70: #{wide_basic_forward.1} parent=5 // pred_check_branch
      %1128 = sbr.rel (%p1126) target = $region72
    $region71: #{wide_basic_forward.1} parent=5 // pred_region
      %s1129 = ssub.s32 %s17, 2
      // Predicated region
      $region73: #{wide_basic_forward.1} parent=71 // pred_check
        %p1130 = pneg %p282
      $region74: #{wide_basic_forward.1} parent=71 // pred_check_branch
        %1132 = sbr.rel (%p1130) target = $region76
      $region75: #{wide_basic_forward.1} parent=71 // pred_region
        %p1133 = scmp.lt.s32.totalorder %s23, 1
        %s1134 = scalar_select %p1133, %s23, 1
        %s1135 = smul.addr %s1134, 2
        %s1136 = smul.addr %s1135, 8
        %s1137 = scalar_lea.vmem %s11, %s1136
      $region76: #{wide_basic_forward.1} parent=71 // pred_fallthru
        _
    $region72: #{wide_basic_forward.1} parent=5 // pred_fallthru
      _
  $region6: #{wide_basic_forward.1} parent=0 // loop_footer
    %s21 = sadd.s32 1, %s17
  $region7: #{wide_basic_forward.1} parent=0 // loop_footer_branch
    %16 = sbr.rel target = $region3
  $region8: #{wide_basic_forward.1} parent=0 // loop_exit
    _

</llo_original>
